<compile_context>
chip_gen: v6e
topology: v6e:2x2x1
jax: 0.10.0
libtpu: 0.0.40
codegen_flags: <defaults>
</compile_context>

<pallas_src>
import functools

import jax
import jax.numpy as jnp
from jax import lax
from jax.experimental import pallas as pl
from jax.experimental.pallas import tpu as pltpu


def _sigmoid(x):
    return 1.0 / (1.0 + jnp.exp(-x))


# ------------------------------ fused forward kernel ------------------------------

def _deepfamq_kernel(xcol_ref, prev_ref, wconv_ref, bconv_ref,
                     wihf_ref, wihb_ref, bih_ref, whh_ref,
                     w1p_ref, b1_ref, w2_ref, b2_ref, w3_ref, b3_ref,
                     o_ref, xproj_sc, h_sc,
                     *, N, T, C, H, pool):
    DH = 2 * H                     # fused (fwd|bwd) hidden width
    GN = 8 // N                    # time steps per aligned 8-sublane group
    NG = T // GN                   # number of groups
    f32 = jnp.float32

    # -------- stage 1: conv('same') + ReLU + MaxPool + hoisted LSTM input projection --------
    # One batched matmul over all (t, n) rows; pool offsets are folded into the weight
    # columns so pooling is a lane-aligned max over `pool` C-wide column blocks.
    conv = jnp.dot(xcol_ref[...], wconv_ref[...], preferred_element_type=f32) + bconv_ref[...]
    conv = jnp.maximum(conv, 0.0)                                   # (T*N, pool*C)
    pooled = conv[:, 0:C]
    for p in range(1, pool):
        pooled = jnp.maximum(pooled, conv[:, p * C:(p + 1) * C])    # (T*N, C)

    # Backward-direction inputs are time-reversed via a permutation matmul so the whole
    # gate-interleaved projection lands in scratch in recurrence order: one contiguous
    # (N, 8H) read per step.
    pooled_rev = jnp.dot(prev_ref[...], pooled, preferred_element_type=f32)
    xproj = (jnp.dot(pooled, wihf_ref[...], preferred_element_type=f32)
             + jnp.dot(pooled_rev, wihb_ref[...], preferred_element_type=f32)
             + bih_ref[...])                                        # (T*N, 8H)
    xproj_sc[...] = xproj                                           # single full aligned store

    # -------- stage 2: fused bidirectional LSTM recurrence --------
    # h/c carry both directions as (N, 2H); the block-diagonal W_hh makes the gate update a
    # single (N, 2H) x (2H, 8H) MXU push per step.  Gate column order:
    # [i_f i_b | f_f f_b | g_f g_b | o_f o_b], each block 2H wide.
    whh = whh_ref[...]

    def cell(gates, c):
        i = _sigmoid(gates[:, 0 * DH:1 * DH])
        f = _sigmoid(gates[:, 1 * DH:2 * DH])
        g = jnp.tanh(gates[:, 2 * DH:3 * DH])
        o = _sigmoid(gates[:, 3 * DH:4 * DH])
        c_new = f * c + i * g
        return o * jnp.tanh(c_new), c_new

    def rec_group(grp, carry):
        h, c = carry
        base = pl.multiple_of(grp * 8, 8)
        blk = xproj_sc[pl.ds(base, 8), :]            # (8, 8H): GN steps x N batch, aligned read
        hs = []
        for r in range(GN):                          # static unroll inside the group
            gates = blk[r * N:(r + 1) * N, :] + jnp.dot(h, whh, preferred_element_type=f32)
            h, c = cell(gates, c)
            hs.append(h)
        # One aligned 8-row store per group; off the h/c dependence chain.
        h_sc[pl.ds(base, 8), :] = jnp.concatenate(hs, axis=0)
        return h, c

    zero_hc = jnp.zeros((N, DH), f32)
    _ = lax.fori_loop(0, NG, rec_group, (zero_hc, zero_hc))

    # -------- stage 3: FC head (FC-1 contraction off the serial critical path) --------
    H1 = b1_ref.shape[1]

    def fc1_group(grp, acc):
        base = pl.multiple_of(grp * 8, 8)
        hblk = h_sc[pl.ds(base, 8), :]               # (8, 2H) aligned read
        for r in range(GN):
            w1_t = w1p_ref[grp * GN + r]             # (2H, H1), leading-dim dynamic index
            acc = acc + jnp.dot(hblk[r * N:(r + 1) * N, :], w1_t,
                                preferred_element_type=f32)
        return acc

    acc = lax.fori_loop(0, NG, fc1_group, jnp.zeros((N, H1), f32))
    h1 = jnp.maximum(acc + b1_ref[...], 0.0)
    h2 = jnp.maximum(jnp.dot(h1, w2_ref[...], preferred_element_type=f32) + b2_ref[...], 0.0)
    out = jnp.dot(h2, w3_ref[...], preferred_element_type=f32) + b3_ref[...]
    o_ref[...] = out.astype(o_ref.dtype)


# ------------------------------------ wrapper ------------------------------------

def deepfamq_forward(x, params, *, pool_size, left_pad):
    """x: (N, L, 4) float32; params: packed arrays from pack_params()."""
    N, L, Cin = x.shape
    PC = params["w_conv_po"].shape[1]               # pool * C
    C = PC // pool_size
    KU2 = params["w_conv_po"].shape[0] // Cin
    DH = params["w_hh"].shape[0]                    # 2H
    H = DH // 2
    T = params["w1p"].shape[0]
    H1 = params["b1"].shape[1]
    H2 = params["b2"].shape[1]

    assert 8 % N == 0 and T % (8 // N) == 0, (
        "kernel groups time steps into aligned 8-row blocks; need N | 8 and (8//N) | T")
    # TODO(synk): pad T*N up to a multiple of 8 to lift this restriction for other batch sizes.

    # Strided im2col at the pooled output positions (time-major rows: row = t*N + n).
    # This is the only preprocessing outside the kernel (cheaper than an in-kernel
    # 15-way lane-axis concat of unaligned slices).
    need = (T - 1) * pool_size + KU2
    right_pad = max(0, need - (L + left_pad))
    xpad = jnp.pad(x, ((0, 0), (left_pad, right_pad), (0, 0)))
    taps = [xpad[:, j:j + (T - 1) * pool_size + 1:pool_size, :] for j in range(KU2)]
    xcol = jnp.concatenate(taps, axis=-1)                          # (N, T, KU2*Cin)
    xcol = jnp.transpose(xcol, (1, 0, 2)).reshape(T * N, KU2 * Cin)

    # Time-reversal permutation for the backward LSTM direction (applied by matmul in-kernel).
    perm = ((T - 1 - jnp.arange(T))[:, None] * N + jnp.arange(N)[None, :]).reshape(-1)
    p_rev = jax.nn.one_hot(perm, T * N, dtype=jnp.float32)

    kernel = functools.partial(_deepfamq_kernel, N=N, T=T, C=C, H=H, pool=pool_size)

    out = pl.pallas_call(
        kernel,
        out_shape=jax.ShapeDtypeStruct((N, 1), jnp.float32),
        grid=(1,),
        in_specs=[
            pl.BlockSpec((T * N, KU2 * Cin), lambda i: (0, 0)),
            pl.BlockSpec((T * N, T * N), lambda i: (0, 0)),
            pl.BlockSpec((KU2 * Cin, PC), lambda i: (0, 0)),
            pl.BlockSpec((1, PC), lambda i: (0, 0)),
            pl.BlockSpec((C, 4 * DH), lambda i: (0, 0)),
            pl.BlockSpec((C, 4 * DH), lambda i: (0, 0)),
            pl.BlockSpec((1, 4 * DH), lambda i: (0, 0)),
            pl.BlockSpec((DH, 4 * DH), lambda i: (0, 0)),
            pl.BlockSpec((T, DH, H1), lambda i: (0, 0, 0)),
            pl.BlockSpec((1, H1), lambda i: (0, 0)),
            pl.BlockSpec((H1, H2), lambda i: (0, 0)),
            pl.BlockSpec((1, H2), lambda i: (0, 0)),
            pl.BlockSpec((H2, 1), lambda i: (0, 0)),
            pl.BlockSpec((1, 1), lambda i: (0, 0)),
        ],
        out_specs=pl.BlockSpec((N, 1), lambda i: (0, 0)),
        scratch_shapes=[pltpu.VMEM((T * N, 4 * DH), jnp.float32),   # hoisted gate projection
                        pltpu.VMEM((T * N, DH), jnp.float32)],      # per-step hidden states
        compiler_params=pltpu.CompilerParams(dimension_semantics=("arbitrary",)),
    )(xcol, p_rev, params["w_conv_po"], params["b_conv_po"],
      params["w_ih_f"], params["w_ih_b"], params["b_ih"], params["w_hh"],
      params["w1p"], params["b1"], params["w2"], params["b2"],
      params["w3"], params["b3"])
    return jnp.squeeze(out, axis=-1)


# --------------------------- parameter init / packing ---------------------------

def init_params(key, *, conv_out_dim, conv_kernel_sizes, lstm_hidden, fc_hidden,
                pool_out_len, in_ch=4):
    """Random params in PyTorch-equivalent layouts."""
    c_each = conv_out_dim // len(conv_kernel_sizes)
    keys = iter(jax.random.split(key, 32))

    def nrm(shape, scale=0.1):
        return (scale * jax.random.normal(next(keys), shape)).astype(jnp.float32)

    conv = [{"weight": nrm((c_each, in_ch, k)),          # Conv1d weight (Cout, Cin, K)
             "bias": nrm((c_each,))}
            for k in conv_kernel_sizes]

    D, H = conv_out_dim, lstm_hidden
    lstm = {                                              # PyTorch LSTM layouts, gates i,f,g,o
        "w_ih_f": nrm((4 * H, D)), "w_hh_f": nrm((4 * H, H)),
        "b_ih_f": nrm((4 * H,)), "b_hh_f": nrm((4 * H,)),
        "w_ih_b": nrm((4 * H, D)), "w_hh_b": nrm((4 * H, H)),
        "b_ih_b": nrm((4 * H,)), "b_hh_b": nrm((4 * H,)),
    }
    F = 2 * H * pool_out_len
    fc = {                                                # nn.Linear layouts (out, in)
        "w1": nrm((fc_hidden, F), scale=0.02), "b1": nrm((fc_hidden,)),
        "w2": nrm((fc_hidden, fc_hidden)), "b2": nrm((fc_hidden,)),
        "w3": nrm((1, fc_hidden)), "b3": nrm((1,)),
    }
    return {"conv": conv, "lstm": lstm, "fc": fc}


def pack_params(p, *, conv_kernel_sizes, pool_size, in_ch=4):
    """Convert PyTorch-layout params into the fused kernel's layouts (done once)."""
    ks = list(conv_kernel_sizes)
    lefts = [(k - 1) // 2 for k in ks]                    # PyTorch padding='same'
    left_max = max(lefts)
    right_max = max(k - 1 - l for k, l in zip(ks, lefts))
    ku = left_max + right_max + 1
    ku2 = ku + pool_size - 1                              # im2col taps per pooled output

    c_each = [blk["weight"].shape[0] for blk in p["conv"]]
    C = sum(c_each)

    # Union im2col conv weight (ku*Cin, C), channel blocks in torch.cat order.
    w_u = jnp.zeros((ku * in_ch, C), jnp.float32)
    b_parts, col = [], 0
    for blk, k, l, ce in zip(p["conv"], ks, lefts, c_each):
        wt = jnp.transpose(blk["weight"], (2, 1, 0)).reshape(k * in_ch, ce)  # (K*Cin, Cout)
        off = left_max - l
        w_u = w_u.at[off * in_ch:(off + k) * in_ch, col:col + ce].set(wt)
        b_parts.append(blk["bias"])
        col += ce
    b_u = jnp.concatenate(b_parts)

    # Pool-fused weight: output column block p computes the conv at pooled offset p.
    w_conv_po = jnp.zeros((ku2 * in_ch, pool_size * C), jnp.float32)
    for pp in range(pool_size):
        w_conv_po = w_conv_po.at[pp * in_ch:(pp + ku) * in_ch,
                                 pp * C:(pp + 1) * C].set(w_u)
    b_conv_po = jnp.tile(b_u, pool_size)[None, :]

    lt = p["lstm"]
    H = lt["w_hh_f"].shape[1]
    D = lt["w_ih_f"].shape[1]

    def interleave(mat_f, mat_b):
        # PyTorch gate-order columns [i|f|g|o] (each H wide) -> fused order
        # [i_f i_b | f_f f_b | g_f g_b | o_f o_b] (each block H wide).
        return jnp.concatenate(
            [m[:, gi * H:(gi + 1) * H] for gi in range(4) for m in (mat_f, mat_b)],
            axis=1)

    zD = jnp.zeros((D, 4 * H), jnp.float32)
    zH = jnp.zeros((H, 4 * H), jnp.float32)
    w_ih_f = interleave(lt["w_ih_f"].T, zD)               # applied to pooled (natural time)
    w_ih_b = interleave(zD, lt["w_ih_b"].T)               # applied to time-reversed pooled
    b_ih = interleave((lt["b_ih_f"] + lt["b_hh_f"])[None, :],
                      (lt["b_ih_b"] + lt["b_hh_b"])[None, :])
    w_hh = jnp.concatenate([interleave(lt["w_hh_f"].T, zH),
                            interleave(zH, lt["w_hh_b"].T)], axis=0)   # (2H, 8H) block-diagonal

    fc = p["fc"]
    H1, F = fc["w1"].shape
    T = F // (2 * H)
    # PyTorch Flatten order of permute(1,2,0): feature index = feat*T + t.
    w1T = fc["w1"].T                                                    # (F, H1)
    w1f = jnp.transpose(w1T[:H * T].reshape(H, T, H1), (1, 0, 2))       # (T, H, H1), [t, feat]
    # Backward h produced at loop step s is the output at position T-1-s.
    w1b = jnp.transpose(w1T[H * T:].reshape(H, T, H1), (1, 0, 2))[::-1]
    w1p = jnp.concatenate([w1f, w1b], axis=1)                           # (T, 2H, H1)

    return {
        "w_conv_po": w_conv_po, "b_conv_po": b_conv_po,
        "w_ih_f": w_ih_f, "w_ih_b": w_ih_b, "b_ih": b_ih, "w_hh": w_hh,
        "w1p": w1p, "b1": fc["b1"][None, :],
        "w2": fc["w2"].T, "b2": fc["b2"][None, :],
        "w3": fc["w3"].T, "b3": fc["b3"][None, :],
    }


# --------------------------------------- main ---------------------------------------

if __name__ == "__main__":
    # Small config consistent with the module (seq length 110 is hard-wired via the
    # pool_out_len formula in __init__).
    N = 2
    L = 110
    POOL = 3
    POOL_OUT_LEN = int(1 + (110 - POOL) / POOL)          # = 36, as in the module
    CONV_OUT_DIM = 32                                    # -> conv_each_dim = 16
    KERNEL_SIZES = [10, 15]
    LSTM_HIDDEN = 32
    FC_HIDDEN = 32
    LEFT_PAD = max((k - 1) // 2 for k in KERNEL_SIZES)   # PyTorch 'same' left padding

    key = jax.random.PRNGKey(0)
    kx, kparam = jax.random.split(key)
    x = jax.random.normal(kx, (N, L, 4), dtype=jnp.float32)

    raw = init_params(kparam, conv_out_dim=CONV_OUT_DIM, conv_kernel_sizes=KERNEL_SIZES,
                      lstm_hidden=LSTM_HIDDEN, fc_hidden=FC_HIDDEN,
                      pool_out_len=POOL_OUT_LEN)
    packed = pack_params(raw, conv_kernel_sizes=KERNEL_SIZES, pool_size=POOL, in_ch=4)

    fwd = jax.jit(functools.partial(deepfamq_forward, pool_size=POOL, left_pad=LEFT_PAD))
    out = jax.block_until_ready(fwd(x, packed))
    assert out.shape == (N,)
    assert bool(jnp.all(jnp.isfinite(out)))
    print("KERNEL_OK")
</pallas_src>

<mosaic_0001>
module attributes {stable_mosaic.version = 11 : i64} {
  func.func @_deepfamq_kernel(%arg0: i32, %arg1: memref<72x68xf32, #tpu.memory_space<vmem>>, %arg2: memref<72x72xf32, #tpu.memory_space<vmem>>, %arg3: memref<68x96xf32, #tpu.memory_space<vmem>>, %arg4: memref<1x96xf32, #tpu.memory_space<vmem>>, %arg5: memref<32x256xf32, #tpu.memory_space<vmem>>, %arg6: memref<32x256xf32, #tpu.memory_space<vmem>>, %arg7: memref<1x256xf32, #tpu.memory_space<vmem>>, %arg8: memref<64x256xf32, #tpu.memory_space<vmem>>, %arg9: memref<36x64x32xf32, #tpu.memory_space<vmem>>, %arg10: memref<1x32xf32, #tpu.memory_space<vmem>>, %arg11: memref<32x32xf32, #tpu.memory_space<vmem>>, %arg12: memref<1x32xf32, #tpu.memory_space<vmem>>, %arg13: memref<32x1xf32, #tpu.memory_space<vmem>>, %arg14: memref<1x1xf32, #tpu.memory_space<vmem>>, %arg15: memref<2x1xf32, #tpu.memory_space<vmem>>, %arg16: memref<72x256xf32, #tpu.memory_space<vmem>>, %arg17: memref<72x64xf32, #tpu.memory_space<vmem>>) attributes {dimension_semantics = [#tpu.dimension_semantics<arbitrary>], iteration_bounds = array<i64: 1>, scalar_prefetch = 0 : i64, scratch_operands = 2 : i64, tpu.core_type = #tpu.core_type<tc>, window_params = [{pipeline_mode = #tpu.pipeline_mode<synchronous>, transform_indices = @transform_0, window_bounds = array<i64: 72, 68>}, {pipeline_mode = #tpu.pipeline_mode<synchronous>, transform_indices = @transform_1, window_bounds = array<i64: 72, 72>}, {pipeline_mode = #tpu.pipeline_mode<synchronous>, transform_indices = @transform_2, window_bounds = array<i64: 68, 96>}, {pipeline_mode = #tpu.pipeline_mode<synchronous>, transform_indices = @transform_3, window_bounds = array<i64: 1, 96>}, {pipeline_mode = #tpu.pipeline_mode<synchronous>, transform_indices = @transform_4, window_bounds = array<i64: 32, 256>}, {pipeline_mode = #tpu.pipeline_mode<synchronous>, transform_indices = @transform_5, window_bounds = array<i64: 32, 256>}, {pipeline_mode = #tpu.pipeline_mode<synchronous>, transform_indices = @transform_6, window_bounds = array<i64: 1, 256>}, {pipeline_mode = #tpu.pipeline_mode<synchronous>, transform_indices = @transform_7, window_bounds = array<i64: 64, 256>}, {pipeline_mode = #tpu.pipeline_mode<synchronous>, transform_indices = @transform_8, window_bounds = array<i64: 36, 64, 32>}, {pipeline_mode = #tpu.pipeline_mode<synchronous>, transform_indices = @transform_9, window_bounds = array<i64: 1, 32>}, {pipeline_mode = #tpu.pipeline_mode<synchronous>, transform_indices = @transform_10, window_bounds = array<i64: 32, 32>}, {pipeline_mode = #tpu.pipeline_mode<synchronous>, transform_indices = @transform_11, window_bounds = array<i64: 1, 32>}, {pipeline_mode = #tpu.pipeline_mode<synchronous>, transform_indices = @transform_12, window_bounds = array<i64: 32, 1>}, {pipeline_mode = #tpu.pipeline_mode<synchronous>, transform_indices = @transform_13, window_bounds = array<i64: 1, 1>}, {pipeline_mode = #tpu.pipeline_mode<synchronous>, transform_indices = @transform_14, window_bounds = array<i64: 2, 1>}]} {
    %c0 = arith.constant 0 : index
    %c0_0 = arith.constant 0 : index
    %0 = vector.load %arg1[%c0, %c0_0] : memref<72x68xf32, #tpu.memory_space<vmem>>, vector<72x68xf32>
    %c0_1 = arith.constant 0 : index
    %c0_2 = arith.constant 0 : index
    %1 = vector.load %arg3[%c0_1, %c0_2] : memref<68x96xf32, #tpu.memory_space<vmem>>, vector<68x96xf32>
    %cst = arith.constant dense<0.000000e+00> : vector<72x96xf32>
    %2 = tpu.matmul %0, %1, %cst {dimension_numbers = #tpu.dot_dimension_numbers<[1], [0], [0], [1], [0, 0, 1, 1], [], []>} : vector<72x68xf32>, vector<68x96xf32>, vector<72x96xf32> -> vector<72x96xf32>
    %c0_3 = arith.constant 0 : index
    %c0_4 = arith.constant 0 : index
    %3 = vector.load %arg4[%c0_3, %c0_4] : memref<1x96xf32, #tpu.memory_space<vmem>>, vector<1x96xf32>
    %4 = vector.broadcast %3 : vector<1x96xf32> to vector<72x96xf32>
    %5 = arith.addf %2, %4 : vector<72x96xf32>
    %cst_5 = arith.constant 0.000000e+00 : f32
    %6 = vector.broadcast %cst_5 : f32 to vector<72x96xf32>
    %7 = arith.maximumf %5, %6 : vector<72x96xf32>
    %8 = vector.extract_strided_slice %7 {offsets = [0, 0], sizes = [72, 32], strides = [1, 1]} : vector<72x96xf32> to vector<72x32xf32>
    %9 = vector.extract_strided_slice %7 {offsets = [0, 32], sizes = [72, 32], strides = [1, 1]} : vector<72x96xf32> to vector<72x32xf32>
    %10 = arith.maximumf %8, %9 : vector<72x32xf32>
    %11 = vector.extract_strided_slice %7 {offsets = [0, 64], sizes = [72, 32], strides = [1, 1]} : vector<72x96xf32> to vector<72x32xf32>
    %12 = arith.maximumf %10, %11 : vector<72x32xf32>
    %c0_6 = arith.constant 0 : index
    %c0_7 = arith.constant 0 : index
    %13 = vector.load %arg2[%c0_6, %c0_7] : memref<72x72xf32, #tpu.memory_space<vmem>>, vector<72x72xf32>
    %cst_8 = arith.constant dense<0.000000e+00> : vector<72x32xf32>
    %14 = tpu.matmul %13, %12, %cst_8 {dimension_numbers = #tpu.dot_dimension_numbers<[1], [0], [0], [1], [0, 0, 1, 1], [], []>} : vector<72x72xf32>, vector<72x32xf32>, vector<72x32xf32> -> vector<72x32xf32>
    %c0_9 = arith.constant 0 : index
    %c0_10 = arith.constant 0 : index
    %15 = vector.load %arg5[%c0_9, %c0_10] : memref<32x256xf32, #tpu.memory_space<vmem>>, vector<32x256xf32>
    %cst_11 = arith.constant dense<0.000000e+00> : vector<72x256xf32>
    %16 = tpu.matmul %12, %15, %cst_11 {dimension_numbers = #tpu.dot_dimension_numbers<[1], [0], [0], [1], [0, 0, 1, 1], [], []>} : vector<72x32xf32>, vector<32x256xf32>, vector<72x256xf32> -> vector<72x256xf32>
    %c0_12 = arith.constant 0 : index
    %c0_13 = arith.constant 0 : index
    %17 = vector.load %arg6[%c0_12, %c0_13] : memref<32x256xf32, #tpu.memory_space<vmem>>, vector<32x256xf32>
    %cst_14 = arith.constant dense<0.000000e+00> : vector<72x256xf32>
    %18 = tpu.matmul %14, %17, %cst_14 {dimension_numbers = #tpu.dot_dimension_numbers<[1], [0], [0], [1], [0, 0, 1, 1], [], []>} : vector<72x32xf32>, vector<32x256xf32>, vector<72x256xf32> -> vector<72x256xf32>
    %19 = arith.addf %16, %18 : vector<72x256xf32>
    %c0_15 = arith.constant 0 : index
    %c0_16 = arith.constant 0 : index
    %20 = vector.load %arg7[%c0_15, %c0_16] : memref<1x256xf32, #tpu.memory_space<vmem>>, vector<1x256xf32>
    %21 = vector.broadcast %20 : vector<1x256xf32> to vector<72x256xf32>
    %22 = arith.addf %19, %21 : vector<72x256xf32>
    %c0_17 = arith.constant 0 : index
    %c0_18 = arith.constant 0 : index
    %23 = vector.load %arg16[%c0_17, %c0_18] : memref<72x256xf32, #tpu.memory_space<vmem>>, vector<72x256xf32>
    tpu.vector_store %arg16[%c0_17, %c0_18], %22 {strides = array<i32>} : memref<72x256xf32, #tpu.memory_space<vmem>>, vector<72x256xf32>,
    %c0_19 = arith.constant 0 : index
    %c0_20 = arith.constant 0 : index
    %24 = vector.load %arg8[%c0_19, %c0_20] : memref<64x256xf32, #tpu.memory_space<vmem>>, vector<64x256xf32>
    %cst_21 = arith.constant 0.000000e+00 : f32
    %25 = vector.broadcast %cst_21 : f32 to vector<2x64xf32>
    %c0_i32 = arith.constant 0 : i32
    %c9_i32 = arith.constant 9 : i32
    %26 = arith.addi %c0_i32, %c9_i32 : i32
    %c1_i32 = arith.constant 1 : i32
    %27:2 = scf.for %arg18 = %c0_i32 to %26 step %c1_i32 iter_args(%arg19 = %25, %arg20 = %25) -> (vector<2x64xf32>, vector<2x64xf32>)  : i32 {
      %c8_i32 = arith.constant 8 : i32
      %49 = arith.muli %arg18, %c8_i32 : i32
      %50 = tpu.assume_multiple %49, 8 : i32
      %51 = arith.index_cast %50 : i32 to index
      %c0_44 = arith.constant 0 : index
      %52 = vector.load %arg16[%51, %c0_44] : memref<72x256xf32, #tpu.memory_space<vmem>>, vector<8x256xf32>
      %53 = vector.extract_strided_slice %52 {offsets = [0, 0], sizes = [2, 256], strides = [1, 1]} : vector<8x256xf32> to vector<2x256xf32>
      %cst_45 = arith.constant dense<0.000000e+00> : vector<2x256xf32>
      %54 = tpu.matmul %arg19, %24, %cst_45 {dimension_numbers = #tpu.dot_dimension_numbers<[1], [0], [0], [1], [0, 0, 1, 1], [], []>} : vector<2x64xf32>, vector<64x256xf32>, vector<2x256xf32> -> vector<2x256xf32>
      %55 = arith.addf %53, %54 : vector<2x256xf32>
      %56 = vector.extract_strided_slice %55 {offsets = [0, 0], sizes = [2, 64], strides = [1, 1]} : vector<2x256xf32> to vector<2x64xf32>
      %cst_46 = arith.constant 0.000000e+00 : f32
      %57 = vector.broadcast %cst_46 : f32 to vector<2x64xf32>
      %58 = arith.subf %57, %56 : vector<2x64xf32>
      %59 = math.exp %58 : vector<2x64xf32>
      %cst_47 = arith.constant 1.000000e+00 : f32
      %60 = vector.broadcast %cst_47 : f32 to vector<2x64xf32>
      %61 = arith.addf %60, %59 : vector<2x64xf32>
      %cst_48 = arith.constant 1.000000e+00 : f32
      %62 = vector.broadcast %cst_48 : f32 to vector<2x64xf32>
      %63 = arith.divf %62, %61 : vector<2x64xf32>
      %64 = vector.extract_strided_slice %55 {offsets = [0, 64], sizes = [2, 64], strides = [1, 1]} : vector<2x256xf32> to vector<2x64xf32>
      %cst_49 = arith.constant 0.000000e+00 : f32
      %65 = vector.broadcast %cst_49 : f32 to vector<2x64xf32>
      %66 = arith.subf %65, %64 : vector<2x64xf32>
      %67 = math.exp %66 : vector<2x64xf32>
      %cst_50 = arith.constant 1.000000e+00 : f32
      %68 = vector.broadcast %cst_50 : f32 to vector<2x64xf32>
      %69 = arith.addf %68, %67 : vector<2x64xf32>
      %cst_51 = arith.constant 1.000000e+00 : f32
      %70 = vector.broadcast %cst_51 : f32 to vector<2x64xf32>
      %71 = arith.divf %70, %69 : vector<2x64xf32>
      %72 = vector.extract_strided_slice %55 {offsets = [0, 128], sizes = [2, 64], strides = [1, 1]} : vector<2x256xf32> to vector<2x64xf32>
      %73 = math.tanh %72 : vector<2x64xf32>
      %74 = vector.extract_strided_slice %55 {offsets = [0, 192], sizes = [2, 64], strides = [1, 1]} : vector<2x256xf32> to vector<2x64xf32>
      %cst_52 = arith.constant 0.000000e+00 : f32
      %75 = vector.broadcast %cst_52 : f32 to vector<2x64xf32>
      %76 = arith.subf %75, %74 : vector<2x64xf32>
      %77 = math.exp %76 : vector<2x64xf32>
      %cst_53 = arith.constant 1.000000e+00 : f32
      %78 = vector.broadcast %cst_53 : f32 to vector<2x64xf32>
      %79 = arith.addf %78, %77 : vector<2x64xf32>
      %cst_54 = arith.constant 1.000000e+00 : f32
      %80 = vector.broadcast %cst_54 : f32 to vector<2x64xf32>
      %81 = arith.divf %80, %79 : vector<2x64xf32>
      %82 = arith.mulf %71, %arg20 : vector<2x64xf32>
      %83 = arith.mulf %63, %73 : vector<2x64xf32>
      %84 = arith.addf %82, %83 : vector<2x64xf32>
      %85 = math.tanh %84 : vector<2x64xf32>
      %86 = arith.mulf %81, %85 : vector<2x64xf32>
      %87 = vector.extract_strided_slice %52 {offsets = [2, 0], sizes = [2, 256], strides = [1, 1]} : vector<8x256xf32> to vector<2x256xf32>
      %cst_55 = arith.constant dense<0.000000e+00> : vector<2x256xf32>
      %88 = tpu.matmul %86, %24, %cst_55 {dimension_numbers = #tpu.dot_dimension_numbers<[1], [0], [0], [1], [0, 0, 1, 1], [], []>} : vector<2x64xf32>, vector<64x256xf32>, vector<2x256xf32> -> vector<2x256xf32>
      %89 = arith.addf %87, %88 : vector<2x256xf32>
      %90 = vector.extract_strided_slice %89 {offsets = [0, 0], sizes = [2, 64], strides = [1, 1]} : vector<2x256xf32> to vector<2x64xf32>
      %cst_56 = arith.constant 0.000000e+00 : f32
      %91 = vector.broadcast %cst_56 : f32 to vector<2x64xf32>
      %92 = arith.subf %91, %90 : vector<2x64xf32>
      %93 = math.exp %92 : vector<2x64xf32>
      %cst_57 = arith.constant 1.000000e+00 : f32
      %94 = vector.broadcast %cst_57 : f32 to vector<2x64xf32>
      %95 = arith.addf %94, %93 : vector<2x64xf32>
      %cst_58 = arith.constant 1.000000e+00 : f32
      %96 = vector.broadcast %cst_58 : f32 to vector<2x64xf32>
      %97 = arith.divf %96, %95 : vector<2x64xf32>
      %98 = vector.extract_strided_slice %89 {offsets = [0, 64], sizes = [2, 64], strides = [1, 1]} : vector<2x256xf32> to vector<2x64xf32>
      %cst_59 = arith.constant 0.000000e+00 : f32
      %99 = vector.broadcast %cst_59 : f32 to vector<2x64xf32>
      %100 = arith.subf %99, %98 : vector<2x64xf32>
      %101 = math.exp %100 : vector<2x64xf32>
      %cst_60 = arith.constant 1.000000e+00 : f32
      %102 = vector.broadcast %cst_60 : f32 to vector<2x64xf32>
      %103 = arith.addf %102, %101 : vector<2x64xf32>
      %cst_61 = arith.constant 1.000000e+00 : f32
      %104 = vector.broadcast %cst_61 : f32 to vector<2x64xf32>
      %105 = arith.divf %104, %103 : vector<2x64xf32>
      %106 = vector.extract_strided_slice %89 {offsets = [0, 128], sizes = [2, 64], strides = [1, 1]} : vector<2x256xf32> to vector<2x64xf32>
      %107 = math.tanh %106 : vector<2x64xf32>
      %108 = vector.extract_strided_slice %89 {offsets = [0, 192], sizes = [2, 64], strides = [1, 1]} : vector<2x256xf32> to vector<2x64xf32>
      %cst_62 = arith.constant 0.000000e+00 : f32
      %109 = vector.broadcast %cst_62 : f32 to vector<2x64xf32>
      %110 = arith.subf %109, %108 : vector<2x64xf32>
      %111 = math.exp %110 : vector<2x64xf32>
      %cst_63 = arith.constant 1.000000e+00 : f32
      %112 = vector.broadcast %cst_63 : f32 to vector<2x64xf32>
      %113 = arith.addf %112, %111 : vector<2x64xf32>
      %cst_64 = arith.constant 1.000000e+00 : f32
      %114 = vector.broadcast %cst_64 : f32 to vector<2x64xf32>
      %115 = arith.divf %114, %113 : vector<2x64xf32>
      %116 = arith.mulf %105, %84 : vector<2x64xf32>
      %117 = arith.mulf %97, %107 : vector<2x64xf32>
      %118 = arith.addf %116, %117 : vector<2x64xf32>
      %119 = math.tanh %118 : vector<2x64xf32>
      %120 = arith.mulf %115, %119 : vector<2x64xf32>
      %121 = vector.extract_strided_slice %52 {offsets = [4, 0], sizes = [2, 256], strides = [1, 1]} : vector<8x256xf32> to vector<2x256xf32>
      %cst_65 = arith.constant dense<0.000000e+00> : vector<2x256xf32>
      %122 = tpu.matmul %120, %24, %cst_65 {dimension_numbers = #tpu.dot_dimension_numbers<[1], [0], [0], [1], [0, 0, 1, 1], [], []>} : vector<2x64xf32>, vector<64x256xf32>, vector<2x256xf32> -> vector<2x256xf32>
      %123 = arith.addf %121, %122 : vector<2x256xf32>
      %124 = vector.extract_strided_slice %123 {offsets = [0, 0], sizes = [2, 64], strides = [1, 1]} : vector<2x256xf32> to vector<2x64xf32>
      %cst_66 = arith.constant 0.000000e+00 : f32
      %125 = vector.broadcast %cst_66 : f32 to vector<2x64xf32>
      %126 = arith.subf %125, %124 : vector<2x64xf32>
      %127 = math.exp %126 : vector<2x64xf32>
      %cst_67 = arith.constant 1.000000e+00 : f32
      %128 = vector.broadcast %cst_67 : f32 to vector<2x64xf32>
      %129 = arith.addf %128, %127 : vector<2x64xf32>
      %cst_68 = arith.constant 1.000000e+00 : f32
      %130 = vector.broadcast %cst_68 : f32 to vector<2x64xf32>
      %131 = arith.divf %130, %129 : vector<2x64xf32>
      %132 = vector.extract_strided_slice %123 {offsets = [0, 64], sizes = [2, 64], strides = [1, 1]} : vector<2x256xf32> to vector<2x64xf32>
      %cst_69 = arith.constant 0.000000e+00 : f32
      %133 = vector.broadcast %cst_69 : f32 to vector<2x64xf32>
      %134 = arith.subf %133, %132 : vector<2x64xf32>
      %135 = math.exp %134 : vector<2x64xf32>
      %cst_70 = arith.constant 1.000000e+00 : f32
      %136 = vector.broadcast %cst_70 : f32 to vector<2x64xf32>
      %137 = arith.addf %136, %135 : vector<2x64xf32>
      %cst_71 = arith.constant 1.000000e+00 : f32
      %138 = vector.broadcast %cst_71 : f32 to vector<2x64xf32>
      %139 = arith.divf %138, %137 : vector<2x64xf32>
      %140 = vector.extract_strided_slice %123 {offsets = [0, 128], sizes = [2, 64], strides = [1, 1]} : vector<2x256xf32> to vector<2x64xf32>
      %141 = math.tanh %140 : vector<2x64xf32>
      %142 = vector.extract_strided_slice %123 {offsets = [0, 192], sizes = [2, 64], strides = [1, 1]} : vector<2x256xf32> to vector<2x64xf32>
      %cst_72 = arith.constant 0.000000e+00 : f32
      %143 = vector.broadcast %cst_72 : f32 to vector<2x64xf32>
      %144 = arith.subf %143, %142 : vector<2x64xf32>
      %145 = math.exp %144 : vector<2x64xf32>
      %cst_73 = arith.constant 1.000000e+00 : f32
      %146 = vector.broadcast %cst_73 : f32 to vector<2x64xf32>
      %147 = arith.addf %146, %145 : vector<2x64xf32>
      %cst_74 = arith.constant 1.000000e+00 : f32
      %148 = vector.broadcast %cst_74 : f32 to vector<2x64xf32>
      %149 = arith.divf %148, %147 : vector<2x64xf32>
      %150 = arith.mulf %139, %118 : vector<2x64xf32>
      %151 = arith.mulf %131, %141 : vector<2x64xf32>
      %152 = arith.addf %150, %151 : vector<2x64xf32>
      %153 = math.tanh %152 : vector<2x64xf32>
      %154 = arith.mulf %149, %153 : vector<2x64xf32>
      %155 = vector.extract_strided_slice %52 {offsets = [6, 0], sizes = [2, 256], strides = [1, 1]} : vector<8x256xf32> to vector<2x256xf32>
      %cst_75 = arith.constant dense<0.000000e+00> : vector<2x256xf32>
      %156 = tpu.matmul %154, %24, %cst_75 {dimension_numbers = #tpu.dot_dimension_numbers<[1], [0], [0], [1], [0, 0, 1, 1], [], []>} : vector<2x64xf32>, vector<64x256xf32>, vector<2x256xf32> -> vector<2x256xf32>
      %157 = arith.addf %155, %156 : vector<2x256xf32>
      %158 = vector.extract_strided_slice %157 {offsets = [0, 0], sizes = [2, 64], strides = [1, 1]} : vector<2x256xf32> to vector<2x64xf32>
      %cst_76 = arith.constant 0.000000e+00 : f32
      %159 = vector.broadcast %cst_76 : f32 to vector<2x64xf32>
      %160 = arith.subf %159, %158 : vector<2x64xf32>
      %161 = math.exp %160 : vector<2x64xf32>
      %cst_77 = arith.constant 1.000000e+00 : f32
      %162 = vector.broadcast %cst_77 : f32 to vector<2x64xf32>
      %163 = arith.addf %162, %161 : vector<2x64xf32>
      %cst_78 = arith.constant 1.000000e+00 : f32
      %164 = vector.broadcast %cst_78 : f32 to vector<2x64xf32>
      %165 = arith.divf %164, %163 : vector<2x64xf32>
      %166 = vector.extract_strided_slice %157 {offsets = [0, 64], sizes = [2, 64], strides = [1, 1]} : vector<2x256xf32> to vector<2x64xf32>
      %cst_79 = arith.constant 0.000000e+00 : f32
      %167 = vector.broadcast %cst_79 : f32 to vector<2x64xf32>
      %168 = arith.subf %167, %166 : vector<2x64xf32>
      %169 = math.exp %168 : vector<2x64xf32>
      %cst_80 = arith.constant 1.000000e+00 : f32
      %170 = vector.broadcast %cst_80 : f32 to vector<2x64xf32>
      %171 = arith.addf %170, %169 : vector<2x64xf32>
      %cst_81 = arith.constant 1.000000e+00 : f32
      %172 = vector.broadcast %cst_81 : f32 to vector<2x64xf32>
      %173 = arith.divf %172, %171 : vector<2x64xf32>
      %174 = vector.extract_strided_slice %157 {offsets = [0, 128], sizes = [2, 64], strides = [1, 1]} : vector<2x256xf32> to vector<2x64xf32>
      %175 = math.tanh %174 : vector<2x64xf32>
      %176 = vector.extract_strided_slice %157 {offsets = [0, 192], sizes = [2, 64], strides = [1, 1]} : vector<2x256xf32> to vector<2x64xf32>
      %cst_82 = arith.constant 0.000000e+00 : f32
      %177 = vector.broadcast %cst_82 : f32 to vector<2x64xf32>
      %178 = arith.subf %177, %176 : vector<2x64xf32>
      %179 = math.exp %178 : vector<2x64xf32>
      %cst_83 = arith.constant 1.000000e+00 : f32
      %180 = vector.broadcast %cst_83 : f32 to vector<2x64xf32>
      %181 = arith.addf %180, %179 : vector<2x64xf32>
      %cst_84 = arith.constant 1.000000e+00 : f32
      %182 = vector.broadcast %cst_84 : f32 to vector<2x64xf32>
      %183 = arith.divf %182, %181 : vector<2x64xf32>
      %184 = arith.mulf %173, %152 : vector<2x64xf32>
      %185 = arith.mulf %165, %175 : vector<2x64xf32>
      %186 = arith.addf %184, %185 : vector<2x64xf32>
      %187 = math.tanh %186 : vector<2x64xf32>
      %188 = arith.mulf %183, %187 : vector<2x64xf32>
      %189 = tpu.concatenate %86, %120, %154, %188 in 0 : vector<2x64xf32>, vector<2x64xf32>, vector<2x64xf32>, vector<2x64xf32> -> vector<8x64xf32>
      %190 = arith.index_cast %50 : i32 to index
      %c0_85 = arith.constant 0 : index
      %191 = vector.load %arg17[%190, %c0_85] : memref<72x64xf32, #tpu.memory_space<vmem>>, vector<8x64xf32>
      tpu.vector_store %arg17[%190, %c0_85], %189 {strides = array<i32>} : memref<72x64xf32, #tpu.memory_space<vmem>>, vector<8x64xf32>,
      scf.yield %188, %186 : vector<2x64xf32>, vector<2x64xf32>
    }
    %c9_i32_22 = arith.constant 9 : i32
    %cst_23 = arith.constant 0.000000e+00 : f32
    %28 = vector.broadcast %cst_23 : f32 to vector<2x32xf32>
    %c0_i32_24 = arith.constant 0 : i32
    %c9_i32_25 = arith.constant 9 : i32
    %29 = arith.addi %c0_i32_24, %c9_i32_25 : i32
    %c1_i32_26 = arith.constant 1 : i32
    %30 = scf.for %arg18 = %c0_i32_24 to %29 step %c1_i32_26 iter_args(%arg19 = %28) -> (vector<2x32xf32>)  : i32 {
      %c8_i32 = arith.constant 8 : i32
      %49 = arith.muli %arg18, %c8_i32 : i32
      %50 = tpu.assume_multiple %49, 8 : i32
      %51 = arith.index_cast %50 : i32 to index
      %c0_44 = arith.constant 0 : index
      %52 = vector.load %arg17[%51, %c0_44] : memref<72x64xf32, #tpu.memory_space<vmem>>, vector<8x64xf32>
      %c4_i32 = arith.constant 4 : i32
      %53 = arith.muli %arg18, %c4_i32 : i32
      %c0_i32_45 = arith.constant 0 : i32
      %54 = arith.addi %53, %c0_i32_45 : i32
      %55 = arith.index_cast %54 : i32 to index
      %c0_46 = arith.constant 0 : index
      %c0_47 = arith.constant 0 : index
      %56 = vector.load %arg9[%55, %c0_46, %c0_47] : memref<36x64x32xf32, #tpu.memory_space<vmem>>, vector<1x64x32xf32>
      %57 = vector.shape_cast %56 : vector<1x64x32xf32> to vector<64x32xf32>
      %58 = vector.extract_strided_slice %52 {offsets = [0, 0], sizes = [2, 64], strides = [1, 1]} : vector<8x64xf32> to vector<2x64xf32>
      %cst_48 = arith.constant dense<0.000000e+00> : vector<2x32xf32>
      %59 = tpu.matmul %58, %57, %cst_48 {dimension_numbers = #tpu.dot_dimension_numbers<[1], [0], [0], [1], [0, 0, 1, 1], [], []>} : vector<2x64xf32>, vector<64x32xf32>, vector<2x32xf32> -> vector<2x32xf32>
      %60 = arith.addf %arg19, %59 : vector<2x32xf32>
      %c4_i32_49 = arith.constant 4 : i32
      %61 = arith.muli %arg18, %c4_i32_49 : i32
      %c1_i32_50 = arith.constant 1 : i32
      %62 = arith.addi %61, %c1_i32_50 : i32
      %63 = arith.index_cast %62 : i32 to index
      %c0_51 = arith.constant 0 : index
      %c0_52 = arith.constant 0 : index
      %64 = vector.load %arg9[%63, %c0_51, %c0_52] : memref<36x64x32xf32, #tpu.memory_space<vmem>>, vector<1x64x32xf32>
      %65 = vector.shape_cast %64 : vector<1x64x32xf32> to vector<64x32xf32>
      %66 = vector.extract_strided_slice %52 {offsets = [2, 0], sizes = [2, 64], strides = [1, 1]} : vector<8x64xf32> to vector<2x64xf32>
      %cst_53 = arith.constant dense<0.000000e+00> : vector<2x32xf32>
      %67 = tpu.matmul %66, %65, %cst_53 {dimension_numbers = #tpu.dot_dimension_numbers<[1], [0], [0], [1], [0, 0, 1, 1], [], []>} : vector<2x64xf32>, vector<64x32xf32>, vector<2x32xf32> -> vector<2x32xf32>
      %68 = arith.addf %60, %67 : vector<2x32xf32>
      %c4_i32_54 = arith.constant 4 : i32
      %69 = arith.muli %arg18, %c4_i32_54 : i32
      %c2_i32 = arith.constant 2 : i32
      %70 = arith.addi %69, %c2_i32 : i32
      %71 = arith.index_cast %70 : i32 to index
      %c0_55 = arith.constant 0 : index
      %c0_56 = arith.constant 0 : index
      %72 = vector.load %arg9[%71, %c0_55, %c0_56] : memref<36x64x32xf32, #tpu.memory_space<vmem>>, vector<1x64x32xf32>
      %73 = vector.shape_cast %72 : vector<1x64x32xf32> to vector<64x32xf32>
      %74 = vector.extract_strided_slice %52 {offsets = [4, 0], sizes = [2, 64], strides = [1, 1]} : vector<8x64xf32> to vector<2x64xf32>
      %cst_57 = arith.constant dense<0.000000e+00> : vector<2x32xf32>
      %75 = tpu.matmul %74, %73, %cst_57 {dimension_numbers = #tpu.dot_dimension_numbers<[1], [0], [0], [1], [0, 0, 1, 1], [], []>} : vector<2x64xf32>, vector<64x32xf32>, vector<2x32xf32> -> vector<2x32xf32>
      %76 = arith.addf %68, %75 : vector<2x32xf32>
      %c4_i32_58 = arith.constant 4 : i32
      %77 = arith.muli %arg18, %c4_i32_58 : i32
      %c3_i32 = arith.constant 3 : i32
      %78 = arith.addi %77, %c3_i32 : i32
      %79 = arith.index_cast %78 : i32 to index
      %c0_59 = arith.constant 0 : index
      %c0_60 = arith.constant 0 : index
      %80 = vector.load %arg9[%79, %c0_59, %c0_60] : memref<36x64x32xf32, #tpu.memory_space<vmem>>, vector<1x64x32xf32>
      %81 = vector.shape_cast %80 : vector<1x64x32xf32> to vector<64x32xf32>
      %82 = vector.extract_strided_slice %52 {offsets = [6, 0], sizes = [2, 64], strides = [1, 1]} : vector<8x64xf32> to vector<2x64xf32>
      %cst_61 = arith.constant dense<0.000000e+00> : vector<2x32xf32>
      %83 = tpu.matmul %82, %81, %cst_61 {dimension_numbers = #tpu.dot_dimension_numbers<[1], [0], [0], [1], [0, 0, 1, 1], [], []>} : vector<2x64xf32>, vector<64x32xf32>, vector<2x32xf32> -> vector<2x32xf32>
      %84 = arith.addf %76, %83 : vector<2x32xf32>
      scf.yield %84 : vector<2x32xf32>
    }
    %c9_i32_27 = arith.constant 9 : i32
    %c0_28 = arith.constant 0 : index
    %c0_29 = arith.constant 0 : index
    %31 = vector.load %arg10[%c0_28, %c0_29] : memref<1x32xf32, #tpu.memory_space<vmem>>, vector<1x32xf32>
    %32 = vector.broadcast %31 : vector<1x32xf32> to vector<2x32xf32>
    %33 = arith.addf %30, %32 : vector<2x32xf32>
    %cst_30 = arith.constant 0.000000e+00 : f32
    %34 = vector.broadcast %cst_30 : f32 to vector<2x32xf32>
    %35 = arith.maximumf %33, %34 : vector<2x32xf32>
    %c0_31 = arith.constant 0 : index
    %c0_32 = arith.constant 0 : index
    %36 = vector.load %arg11[%c0_31, %c0_32] : memref<32x32xf32, #tpu.memory_space<vmem>>, vector<32x32xf32>
    %cst_33 = arith.constant dense<0.000000e+00> : vector<2x32xf32>
    %37 = tpu.matmul %35, %36, %cst_33 {dimension_numbers = #tpu.dot_dimension_numbers<[1], [0], [0], [1], [0, 0, 1, 1], [], []>} : vector<2x32xf32>, vector<32x32xf32>, vector<2x32xf32> -> vector<2x32xf32>
    %c0_34 = arith.constant 0 : index
    %c0_35 = arith.constant 0 : index
    %38 = vector.load %arg12[%c0_34, %c0_35] : memref<1x32xf32, #tpu.memory_space<vmem>>, vector<1x32xf32>
    %39 = vector.broadcast %38 : vector<1x32xf32> to vector<2x32xf32>
    %40 = arith.addf %37, %39 : vector<2x32xf32>
    %cst_36 = arith.constant 0.000000e+00 : f32
    %41 = vector.broadcast %cst_36 : f32 to vector<2x32xf32>
    %42 = arith.maximumf %40, %41 : vector<2x32xf32>
    %c0_37 = arith.constant 0 : index
    %c0_38 = arith.constant 0 : index
    %43 = vector.load %arg13[%c0_37, %c0_38] : memref<32x1xf32, #tpu.memory_space<vmem>>, vector<32x1xf32>
    %cst_39 = arith.constant dense<0.000000e+00> : vector<2x1xf32>
    %44 = tpu.matmul %42, %43, %cst_39 {dimension_numbers = #tpu.dot_dimension_numbers<[1], [0], [0], [1], [0, 0, 1, 1], [], []>} : vector<2x32xf32>, vector<32x1xf32>, vector<2x1xf32> -> vector<2x1xf32>
    %c0_40 = arith.constant 0 : index
    %c0_41 = arith.constant 0 : index
    %45 = vector.load %arg14[%c0_40, %c0_41] : memref<1x1xf32, #tpu.memory_space<vmem>>, vector<1x1xf32>
    %46 = vector.broadcast %45 : vector<1x1xf32> to vector<2x1xf32>
    %47 = arith.addf %44, %46 : vector<2x1xf32>
    %c0_42 = arith.constant 0 : index
    %c0_43 = arith.constant 0 : index
    %48 = vector.load %arg15[%c0_42, %c0_43] : memref<2x1xf32, #tpu.memory_space<vmem>>, vector<2x1xf32>
    tpu.vector_store %arg15[%c0_42, %c0_43], %47 {strides = array<i32>} : memref<2x1xf32, #tpu.memory_space<vmem>>, vector<2x1xf32>,
    return
  }
  func.func @transform_0(%arg0: i32) -> (i32, i32) {
    %c0_i32 = arith.constant 0 : i32
    %c0_i32_0 = arith.constant 0 : i32
    %c0_i32_1 = arith.constant 0 : i32
    return %c0_i32, %c0_i32_0 : i32, i32
  }
  func.func @transform_1(%arg0: i32) -> (i32, i32) {
    %c0_i32 = arith.constant 0 : i32
    %c0_i32_0 = arith.constant 0 : i32
    %c0_i32_1 = arith.constant 0 : i32
    return %c0_i32, %c0_i32_0 : i32, i32
  }
  func.func @transform_2(%arg0: i32) -> (i32, i32) {
    %c0_i32 = arith.constant 0 : i32
    %c0_i32_0 = arith.constant 0 : i32
    %c0_i32_1 = arith.constant 0 : i32
    return %c0_i32, %c0_i32_0 : i32, i32
  }
  func.func @transform_3(%arg0: i32) -> (i32, i32) {
    %c0_i32 = arith.constant 0 : i32
    %c0_i32_0 = arith.constant 0 : i32
    %c0_i32_1 = arith.constant 0 : i32
    return %c0_i32, %c0_i32_0 : i32, i32
  }
  func.func @transform_4(%arg0: i32) -> (i32, i32) {
    %c0_i32 = arith.constant 0 : i32
    %c0_i32_0 = arith.constant 0 : i32
    %c0_i32_1 = arith.constant 0 : i32
    return %c0_i32, %c0_i32_0 : i32, i32
  }
  func.func @transform_5(%arg0: i32) -> (i32, i32) {
    %c0_i32 = arith.constant 0 : i32
    %c0_i32_0 = arith.constant 0 : i32
    %c0_i32_1 = arith.constant 0 : i32
    return %c0_i32, %c0_i32_0 : i32, i32
  }
  func.func @transform_6(%arg0: i32) -> (i32, i32) {
    %c0_i32 = arith.constant 0 : i32
    %c0_i32_0 = arith.constant 0 : i32
    %c0_i32_1 = arith.constant 0 : i32
    return %c0_i32, %c0_i32_0 : i32, i32
  }
  func.func @transform_7(%arg0: i32) -> (i32, i32) {
    %c0_i32 = arith.constant 0 : i32
    %c0_i32_0 = arith.constant 0 : i32
    %c0_i32_1 = arith.constant 0 : i32
    return %c0_i32, %c0_i32_0 : i32, i32
  }
  func.func @transform_8(%arg0: i32) -> (i32, i32, i32) {
    %c0_i32 = arith.constant 0 : i32
    %c0_i32_0 = arith.constant 0 : i32
    %c0_i32_1 = arith.constant 0 : i32
    %c0_i32_2 = arith.constant 0 : i32
    return %c0_i32, %c0_i32_0, %c0_i32_1 : i32, i32, i32
  }
  func.func @transform_9(%arg0: i32) -> (i32, i32) {
    %c0_i32 = arith.constant 0 : i32
    %c0_i32_0 = arith.constant 0 : i32
    %c0_i32_1 = arith.constant 0 : i32
    return %c0_i32, %c0_i32_0 : i32, i32
  }
  func.func @transform_10(%arg0: i32) -> (i32, i32) {
    %c0_i32 = arith.constant 0 : i32
    %c0_i32_0 = arith.constant 0 : i32
    %c0_i32_1 = arith.constant 0 : i32
    return %c0_i32, %c0_i32_0 : i32, i32
  }
  func.func @transform_11(%arg0: i32) -> (i32, i32) {
    %c0_i32 = arith.constant 0 : i32
    %c0_i32_0 = arith.constant 0 : i32
    %c0_i32_1 = arith.constant 0 : i32
    return %c0_i32, %c0_i32_0 : i32, i32
  }
  func.func @transform_12(%arg0: i32) -> (i32, i32) {
    %c0_i32 = arith.constant 0 : i32
    %c0_i32_0 = arith.constant 0 : i32
    %c0_i32_1 = arith.constant 0 : i32
    return %c0_i32, %c0_i32_0 : i32, i32
  }
  func.func @transform_13(%arg0: i32) -> (i32, i32) {
    %c0_i32 = arith.constant 0 : i32
    %c0_i32_0 = arith.constant 0 : i32
    %c0_i32_1 = arith.constant 0 : i32
    return %c0_i32, %c0_i32_0 : i32, i32
  }
  func.func @transform_14(%arg0: i32) -> (i32, i32) {
    %c0_i32 = arith.constant 0 : i32
    %c0_i32_0 = arith.constant 0 : i32
    %c0_i32_1 = arith.constant 0 : i32
    return %c0_i32, %c0_i32_0 : i32, i32
  }
}

</mosaic_0001>

<llo_original>
// kernel: deepfamq_forward.1
$region0: #{deepfamq_forward.1}
  #allocation0 [shape = 'u32[]', space=smem, size = 0x4, offset = 0x4, fixed_abs, tag = 'smem constant byte address 0x4 - core index']
  #allocation1 [shape = 'u32[144,128]{1,0:T(1,128)}', space=vmem, size = 0x12000, scoped, tag = 'internal scratch']
  #allocation2 [shape = 'f32[72,256]{1,0:T(8,128)}', space=vmem, size = 0x12000, scoped, tag = 'scratch operand']
  #allocation3 [shape = 'f32[72,64]{1,0:T(8,128)}', space=vmem, size = 0x9000, scoped, tag = 'scratch operand']
  #allocation4 [shape = 'f32[1,1]{1,0:T(1,128)S(1)}', space=vmem, size = 0x200, scoped, tag = 'scoped memory for deepfamq_forward.1']
  %s0 = inlined_call_operand.vmem [shape: f32[72,68], index: 0, kind: input, shape index: {}]
  %s1 = inlined_call_operand.vmem [shape: f32[72,72], index: 1, kind: input, shape index: {}]
  %s2 = inlined_call_operand.vmem [shape: f32[68,96], index: 2, kind: input, shape index: {}]
  %s3 = inlined_call_operand.vmem [shape: f32[1,96], index: 3, kind: input, shape index: {}]
  %s4 = inlined_call_operand.vmem [shape: f32[32,256], index: 4, kind: input, shape index: {}]
  %s5 = inlined_call_operand.vmem [shape: f32[32,256], index: 5, kind: input, shape index: {}]
  %s6 = inlined_call_operand.vmem [shape: f32[1,256], index: 6, kind: input, shape index: {}]
  %s7 = inlined_call_operand.vmem [shape: f32[64,256], index: 7, kind: input, shape index: {}]
  %s8 = inlined_call_operand.vmem [shape: f32[36,64,32], index: 8, kind: input, shape index: {}]
  %s9 = inlined_call_operand.vmem [shape: f32[1,32], index: 9, kind: input, shape index: {}]
  %s10 = inlined_call_operand.vmem [shape: f32[32,32], index: 10, kind: input, shape index: {}]
  %s11 = inlined_call_operand.vmem [shape: f32[1,32], index: 11, kind: input, shape index: {}]
  %s12 = inlined_call_operand.vmem [shape: f32[32,1], index: 12, kind: input, shape index: {}]
  %s13 = inlined_call_operand.<no memory space> [shape: f32[1,1], index: 13, kind: input, shape index: {}]
  %s14 = inlined_call_operand.vmem [shape: f32[2,1], index: 14, kind: output, shape index: {}]
  %s15 = sld [smem:[#allocation0]]
  $region80: #{deepfamq_forward.1} parent=0
    _
  %s17 = ssub.s32 1, %s15
  %s18 = scalar_select 0, %s17, %s15
  %v19 = vstv %s13
  %20 = vst [vmem:[#allocation4] sm:$0x1] %v19
  // Predicated region
  $region2: #{deepfamq_forward.1} parent=0 // pred_check
    _
  $region3: #{deepfamq_forward.1} parent=0 // pred_check_branch
    %22 = sbr.rel (0) target = $region5
  $region4: #{deepfamq_forward.1} parent=0 // pred_region
    _
  $region5: #{deepfamq_forward.1} parent=0 // pred_fallthru
    _
  // Predicated region
  $region6: #{deepfamq_forward.1} parent=0 // pred_check
    _
  $region7: #{deepfamq_forward.1} parent=0 // pred_check_branch
    %24 = sbr.rel (0) target = $region9
  $region8: #{deepfamq_forward.1} parent=0 // pred_region
    _
  $region9: #{deepfamq_forward.1} parent=0 // pred_fallthru
    _
  // Predicated region
  $region10: #{deepfamq_forward.1} parent=0 // pred_check
    _
  $region11: #{deepfamq_forward.1} parent=0 // pred_check_branch
    %26 = sbr.rel (0) target = $region13
  $region12: #{deepfamq_forward.1} parent=0 // pred_region
    _
  $region13: #{deepfamq_forward.1} parent=0 // pred_fallthru
    _
  // Predicated region
  $region14: #{deepfamq_forward.1} parent=0 // pred_check
    _
  $region15: #{deepfamq_forward.1} parent=0 // pred_check_branch
    %28 = sbr.rel (0) target = $region17
  $region16: #{deepfamq_forward.1} parent=0 // pred_region
    _
  $region17: #{deepfamq_forward.1} parent=0 // pred_fallthru
    _
  // Predicated region
  $region18: #{deepfamq_forward.1} parent=0 // pred_check
    _
  $region19: #{deepfamq_forward.1} parent=0 // pred_check_branch
    %30 = sbr.rel (0) target = $region21
  $region20: #{deepfamq_forward.1} parent=0 // pred_region
    _
  $region21: #{deepfamq_forward.1} parent=0 // pred_fallthru
    _
  // Predicated region
  $region22: #{deepfamq_forward.1} parent=0 // pred_check
    _
  $region23: #{deepfamq_forward.1} parent=0 // pred_check_branch
    %32 = sbr.rel (0) target = $region25
  $region24: #{deepfamq_forward.1} parent=0 // pred_region
    _
  $region25: #{deepfamq_forward.1} parent=0 // pred_fallthru
    _
  // Predicated region
  $region26: #{deepfamq_forward.1} parent=0 // pred_check
    _
  $region27: #{deepfamq_forward.1} parent=0 // pred_check_branch
    %34 = sbr.rel (0) target = $region29
  $region28: #{deepfamq_forward.1} parent=0 // pred_region
    _
  $region29: #{deepfamq_forward.1} parent=0 // pred_fallthru
    _
  // Predicated region
  $region30: #{deepfamq_forward.1} parent=0 // pred_check
    _
  $region31: #{deepfamq_forward.1} parent=0 // pred_check_branch
    %36 = sbr.rel (0) target = $region33
  $region32: #{deepfamq_forward.1} parent=0 // pred_region
    _
  $region33: #{deepfamq_forward.1} parent=0 // pred_fallthru
    _
  // Predicated region
  $region34: #{deepfamq_forward.1} parent=0 // pred_check
    _
  $region35: #{deepfamq_forward.1} parent=0 // pred_check_branch
    %38 = sbr.rel (0) target = $region37
  $region36: #{deepfamq_forward.1} parent=0 // pred_region
    _
  $region37: #{deepfamq_forward.1} parent=0 // pred_fallthru
    _
  // Predicated region
  $region38: #{deepfamq_forward.1} parent=0 // pred_check
    _
  $region39: #{deepfamq_forward.1} parent=0 // pred_check_branch
    %40 = sbr.rel (0) target = $region41
  $region40: #{deepfamq_forward.1} parent=0 // pred_region
    _
  $region41: #{deepfamq_forward.1} parent=0 // pred_fallthru
    _
  // Predicated region
  $region42: #{deepfamq_forward.1} parent=0 // pred_check
    _
  $region43: #{deepfamq_forward.1} parent=0 // pred_check_branch
    %42 = sbr.rel (0) target = $region45
  $region44: #{deepfamq_forward.1} parent=0 // pred_region
    _
  $region45: #{deepfamq_forward.1} parent=0 // pred_fallthru
    _
  // Predicated region
  $region46: #{deepfamq_forward.1} parent=0 // pred_check
    _
  $region47: #{deepfamq_forward.1} parent=0 // pred_check_branch
    %44 = sbr.rel (0) target = $region49
  $region48: #{deepfamq_forward.1} parent=0 // pred_region
    _
  $region49: #{deepfamq_forward.1} parent=0 // pred_fallthru
    _
  // Predicated region
  $region50: #{deepfamq_forward.1} parent=0 // pred_check
    _
  $region51: #{deepfamq_forward.1} parent=0 // pred_check_branch
    %46 = sbr.rel (0) target = $region53
  $region52: #{deepfamq_forward.1} parent=0 // pred_region
    _
  $region53: #{deepfamq_forward.1} parent=0 // pred_fallthru
    _
  // Predicated region
  $region54: #{deepfamq_forward.1} parent=0 // pred_check
    _
  $region55: #{deepfamq_forward.1} parent=0 // pred_check_branch
    %48 = sbr.rel (0) target = $region57
  $region56: #{deepfamq_forward.1} parent=0 // pred_region
    _
  $region57: #{deepfamq_forward.1} parent=0 // pred_fallthru
    _
  %v49 = vld [vmem:[%s0] sm:$0xff]
  %v50 = vld [vmem:[%s0 + $0x8] sm:$0xff]
  %v51 = vld [vmem:[%s0 + $0x10] sm:$0xff]
  %v52 = vld [vmem:[%s0 + $0x18] sm:$0xff]
  %v53 = vld [vmem:[%s0 + $0x20] sm:$0xff]
  %v54 = vld [vmem:[%s0 + $0x28] sm:$0xff]
  %v55 = vld [vmem:[%s0 + $0x30] sm:$0xff]
  %v56 = vld [vmem:[%s0 + $0x38] sm:$0xff]
  %v57 = vld [vmem:[%s0 + $0x40] sm:$0xff]
  %v58 = vld [vmem:[%s2] sm:$0xff]
  %v59 = vld [vmem:[%s2 + $0x8] sm:$0xff]
  %v60 = vld [vmem:[%s2 + $0x10] sm:$0xff]
  %v61 = vld [vmem:[%s2 + $0x18] sm:$0xff]
  %v62 = vld [vmem:[%s2 + $0x20] sm:$0xff]
  %v63 = vld [vmem:[%s2 + $0x28] sm:$0xff]
  %v64 = vld [vmem:[%s2 + $0x30] sm:$0xff]
  %v65 = vld [vmem:[%s2 + $0x38] sm:$0xff]
  %v66 = vld [vmem:[%s2 + $0x40] sm:$0xf]
  %v67 = vld [vmem:[%s3] sm:$0x1]
  %v69 = vlaneseq
  %v70 = vshrl.u32 %v69, 7
  %v71 = vsub.s32 0, %v70
  %v72 = vrot.slane %v67, %v71
  %vm74 = vcmask 556032
  %v76 = vsel %vm74, %v49, 0
  %v79 = vsel %vm74, %v50, 0
  %v82 = vsel %vm74, %v51, 0
  %v85 = vsel %vm74, %v52, 0
  %v88 = vsel %vm74, %v53, 0
  %v91 = vsel %vm74, %v54, 0
  %v94 = vsel %vm74, %v55, 0
  %v97 = vsel %vm74, %v56, 0
  %v100 = vsel %vm74, %v57, 0
  %vm102 = vcmask 1043456
  %v104 = vsel %vm102, %v66, 0
  %106 = vmatprep.subr.mxu0 0.0
  %107 = vmatpush1.msra.mxu0 0.0
  %108 = vmatprep.subr.mxu0 0.0
  %109 = vmatpush1.msra.mxu0 0.0
  %110 = vmatprep.subr.mxu0 0.0
  %111 = vmatpush1.msra.mxu0 0.0
  %112 = vmatprep.subr.mxu0 0.0
  %113 = vmatpush1.msra.mxu0 0.0
  %114 = vmatprep.subr.mxu0 0.0
  %115 = vmatpush1.msra.mxu0 0.0
  %116 = vmatprep.subr.mxu0 0.0
  %117 = vmatpush1.msra.mxu0 0.0
  %118 = vmatprep.subr.mxu0 0.0
  %119 = vmatpush1.msra.mxu0 0.0
  %120 = vmatprep.subr.mxu0 0.0
  %121 = vmatpush1.msra.mxu0 %v104
  %122 = vmatprep.subr.mxu0 0.0
  %123 = vmatpush1.msra.mxu0 %v65
  %124 = vmatprep.subr.mxu0 0.0
  %125 = vmatpush1.msra.mxu0 %v64
  %126 = vmatprep.subr.mxu0 0.0
  %127 = vmatpush1.msra.mxu0 %v63
  %128 = vmatprep.subr.mxu0 0.0
  %129 = vmatpush1.msra.mxu0 %v62
  %130 = vmatprep.subr.mxu0 0.0
  %131 = vmatpush1.msra.mxu0 %v61
  %132 = vmatprep.subr.mxu0 0.0
  %133 = vmatpush1.msra.mxu0 %v60
  %134 = vmatprep.subr.mxu0 0.0
  %135 = vmatpush1.msra.mxu0 %v59
  %136 = vmatprep.subr.mxu0 0.0
  %137 = vmatpush1.msra.mxu0 %v58
  %138 = vmatprep.subr.mxu0 0.0
  %139 = vmatpush2.msra.mxu0 0.0
  %140 = vmatprep.subr.mxu0 0.0
  %141 = vmatpush2.msra.mxu0 0.0
  %142 = vmatprep.subr.mxu0 0.0
  %143 = vmatpush2.msra.mxu0 0.0
  %144 = vmatprep.subr.mxu0 0.0
  %145 = vmatpush2.msra.mxu0 0.0
  %146 = vmatprep.subr.mxu0 0.0
  %147 = vmatpush2.msra.mxu0 0.0
  %148 = vmatprep.subr.mxu0 0.0
  %149 = vmatpush2.msra.mxu0 0.0
  %150 = vmatprep.subr.mxu0 0.0
  %151 = vmatpush2.msra.mxu0 0.0
  %152 = vmatprep.subr.mxu0 0.0
  %153 = vmatpush2.msra.mxu0 0.0
  %154 = vmatprep.subr.mxu0 0.0
  %155 = vmatpush2.msra.mxu0 0.0
  %156 = vmatprep.subr.mxu0 0.0
  %157 = vmatpush2.msra.mxu0 0.0
  %158 = vmatprep.subr.mxu0 0.0
  %159 = vmatpush2.msra.mxu0 0.0
  %160 = vmatprep.subr.mxu0 0.0
  %161 = vmatpush2.msra.mxu0 0.0
  %162 = vmatprep.subr.mxu0 0.0
  %163 = vmatpush2.msra.mxu0 0.0
  %164 = vmatprep.subr.mxu0 0.0
  %165 = vmatpush2.msra.mxu0 0.0
  %166 = vmatprep.subr.mxu0 0.0
  %167 = vmatpush2.msra.mxu0 0.0
  %168 = vmatprep.subr.mxu0 0.0
  %169 = vmatpush2.msra.mxu0 0.0
  %170 = vmatprep.mubr.f32.mxu0 0.0
  %171 = vmatmul.mubr.f32.gmra.mxu0 %v76
  %v172 = vpop.f32.mrf.mxu0
  %v173 = vadd.f32 %v72, %v172
  %v174 = vpop.f32.mrf.mxu0
  %175 = vmatprep.mubr.f32.mxu0 0.0
  %176 = vmatmul.mubr.f32.gmra.mxu0 %v79
  %v177 = vpop.f32.mrf.mxu0
  %v178 = vadd.f32 %v72, %v177
  %v179 = vpop.f32.mrf.mxu0
  %180 = vmatprep.mubr.f32.mxu0 0.0
  %181 = vmatmul.mubr.f32.gmra.mxu0 %v82
  %v182 = vpop.f32.mrf.mxu0
  %v183 = vadd.f32 %v72, %v182
  %v184 = vpop.f32.mrf.mxu0
  %185 = vmatprep.mubr.f32.mxu0 0.0
  %186 = vmatmul.mubr.f32.gmra.mxu0 %v85
  %v187 = vpop.f32.mrf.mxu0
  %v188 = vadd.f32 %v72, %v187
  %v189 = vpop.f32.mrf.mxu0
  %190 = vmatprep.mubr.f32.mxu0 0.0
  %191 = vmatmul.mubr.f32.gmra.mxu0 %v88
  %v192 = vpop.f32.mrf.mxu0
  %v193 = vadd.f32 %v72, %v192
  %v194 = vpop.f32.mrf.mxu0
  %195 = vmatprep.mubr.f32.mxu0 0.0
  %196 = vmatmul.mubr.f32.gmra.mxu0 %v91
  %v197 = vpop.f32.mrf.mxu0
  %v198 = vadd.f32 %v72, %v197
  %v199 = vpop.f32.mrf.mxu0
  %200 = vmatprep.mubr.f32.mxu0 0.0
  %201 = vmatmul.mubr.f32.gmra.mxu0 %v94
  %v202 = vpop.f32.mrf.mxu0
  %v203 = vadd.f32 %v72, %v202
  %v204 = vpop.f32.mrf.mxu0
  %205 = vmatprep.mubr.f32.mxu0 0.0
  %206 = vmatmul.mubr.f32.gmra.mxu0 %v97
  %v207 = vpop.f32.mrf.mxu0
  %v208 = vadd.f32 %v72, %v207
  %v209 = vpop.f32.mrf.mxu0
  %210 = vmatprep.mubr.f32.mxu0 0.0
  %211 = vmatmul.mubr.f32.gmra.mxu0 %v100
  %v212 = vpop.f32.mrf.mxu0
  %v213 = vadd.f32 %v72, %v212
  %v214 = vpop.f32.mrf.mxu0
  %215 = vdwg.mxu0
  %v216 = vmax.f32 %v173, 0.0
  %v217 = vmax.f32 %v178, 0.0
  %v218 = vmax.f32 %v183, 0.0
  %v219 = vmax.f32 %v188, 0.0
  %v220 = vmax.f32 %v193, 0.0
  %v221 = vmax.f32 %v198, 0.0
  %v222 = vmax.f32 %v203, 0.0
  %v223 = vmax.f32 %v208, 0.0
  %v224 = vmax.f32 %v213, 0.0
  %234 = vrot.lane.b32.xlu0 %v216, 96
  %v235 = vpop.permute.xlu0 %234
  %236 = vrot.lane.b32.xlu0 %v217, 96
  %v237 = vpop.permute.xlu0 %236
  %238 = vrot.lane.b32.xlu0 %v218, 96
  %v239 = vpop.permute.xlu0 %238
  %240 = vrot.lane.b32.xlu0 %v219, 96
  %v241 = vpop.permute.xlu0 %240
  %242 = vrot.lane.b32.xlu0 %v220, 96
  %v243 = vpop.permute.xlu0 %242
  %244 = vrot.lane.b32.xlu0 %v221, 96
  %v245 = vpop.permute.xlu0 %244
  %246 = vrot.lane.b32.xlu0 %v222, 96
  %v247 = vpop.permute.xlu0 %246
  %248 = vrot.lane.b32.xlu0 %v223, 96
  %v249 = vpop.permute.xlu0 %248
  %250 = vrot.lane.b32.xlu0 %v224, 96
  %v251 = vpop.permute.xlu0 %250
  %v261 = vmax.f32 %v216, %v235
  %v262 = vmax.f32 %v217, %v237
  %v263 = vmax.f32 %v218, %v239
  %v264 = vmax.f32 %v219, %v241
  %v265 = vmax.f32 %v220, %v243
  %v266 = vmax.f32 %v221, %v245
  %v267 = vmax.f32 %v222, %v247
  %v268 = vmax.f32 %v223, %v249
  %v269 = vmax.f32 %v224, %v251
  %270 = vrot.lane.b32.xlu0 %v216, 64
  %v271 = vpop.permute.xlu0 %270
  %272 = vrot.lane.b32.xlu0 %v217, 64
  %v273 = vpop.permute.xlu0 %272
  %274 = vrot.lane.b32.xlu0 %v218, 64
  %v275 = vpop.permute.xlu0 %274
  %276 = vrot.lane.b32.xlu0 %v219, 64
  %v277 = vpop.permute.xlu0 %276
  %278 = vrot.lane.b32.xlu0 %v220, 64
  %v279 = vpop.permute.xlu0 %278
  %280 = vrot.lane.b32.xlu0 %v221, 64
  %v281 = vpop.permute.xlu0 %280
  %282 = vrot.lane.b32.xlu0 %v222, 64
  %v283 = vpop.permute.xlu0 %282
  %284 = vrot.lane.b32.xlu0 %v223, 64
  %v285 = vpop.permute.xlu0 %284
  %286 = vrot.lane.b32.xlu0 %v224, 64
  %v287 = vpop.permute.xlu0 %286
  %v297 = vmax.f32 %v261, %v271
  %v298 = vmax.f32 %v262, %v273
  %v299 = vmax.f32 %v263, %v275
  %v300 = vmax.f32 %v264, %v277
  %v301 = vmax.f32 %v265, %v279
  %v302 = vmax.f32 %v266, %v281
  %v303 = vmax.f32 %v267, %v283
  %v304 = vmax.f32 %v268, %v285
  %v305 = vmax.f32 %v269, %v287
  %v306 = vld [vmem:[%s1] sm:$0xff]
  %v307 = vld [vmem:[%s1 + $0x8] sm:$0xff]
  %v308 = vld [vmem:[%s1 + $0x10] sm:$0xff]
  %v309 = vld [vmem:[%s1 + $0x18] sm:$0xff]
  %v310 = vld [vmem:[%s1 + $0x20] sm:$0xff]
  %v311 = vld [vmem:[%s1 + $0x28] sm:$0xff]
  %v312 = vld [vmem:[%s1 + $0x30] sm:$0xff]
  %v313 = vld [vmem:[%s1 + $0x38] sm:$0xff]
  %v314 = vld [vmem:[%s1 + $0x40] sm:$0xff]
  %vm315 = vcmask 588800
  %v317 = vsel %vm315, %v306, 0
  %v320 = vsel %vm315, %v307, 0
  %v323 = vsel %vm315, %v308, 0
  %v326 = vsel %vm315, %v309, 0
  %v329 = vsel %vm315, %v310, 0
  %v332 = vsel %vm315, %v311, 0
  %v335 = vsel %vm315, %v312, 0
  %v338 = vsel %vm315, %v313, 0
  %v341 = vsel %vm315, %v314, 0
  %343 = vmatprep.subr.mxu0 0.0
  %344 = vmatpush1.msra.mxu0 0.0
  %345 = vmatprep.subr.mxu0 0.0
  %346 = vmatpush1.msra.mxu0 0.0
  %347 = vmatprep.subr.mxu0 0.0
  %348 = vmatpush1.msra.mxu0 0.0
  %349 = vmatprep.subr.mxu0 0.0
  %350 = vmatpush1.msra.mxu0 0.0
  %351 = vmatprep.subr.mxu0 0.0
  %352 = vmatpush1.msra.mxu0 0.0
  %353 = vmatprep.subr.mxu0 0.0
  %354 = vmatpush1.msra.mxu0 0.0
  %355 = vmatprep.subr.mxu0 0.0
  %356 = vmatpush1.msra.mxu0 0.0
  %357 = vmatprep.subr.mxu0 0.0
  %358 = vmatpush1.msra.mxu0 %v305
  %359 = vmatprep.subr.mxu0 0.0
  %360 = vmatpush1.msra.mxu0 %v304
  %361 = vmatprep.subr.mxu0 0.0
  %362 = vmatpush1.msra.mxu0 %v303
  %363 = vmatprep.subr.mxu0 0.0
  %364 = vmatpush1.msra.mxu0 %v302
  %365 = vmatprep.subr.mxu0 0.0
  %366 = vmatpush1.msra.mxu0 %v301
  %367 = vmatprep.subr.mxu0 0.0
  %368 = vmatpush1.msra.mxu0 %v300
  %369 = vmatprep.subr.mxu0 0.0
  %370 = vmatpush1.msra.mxu0 %v299
  %371 = vmatprep.subr.mxu0 0.0
  %372 = vmatpush1.msra.mxu0 %v298
  %373 = vmatprep.subr.mxu0 0.0
  %374 = vmatpush1.msra.mxu0 %v297
  %375 = vmatprep.subr.mxu0 0.0
  %376 = vmatpush2.msra.mxu0 0.0
  %377 = vmatprep.subr.mxu0 0.0
  %378 = vmatpush2.msra.mxu0 0.0
  %379 = vmatprep.subr.mxu0 0.0
  %380 = vmatpush2.msra.mxu0 0.0
  %381 = vmatprep.subr.mxu0 0.0
  %382 = vmatpush2.msra.mxu0 0.0
  %383 = vmatprep.subr.mxu0 0.0
  %384 = vmatpush2.msra.mxu0 0.0
  %385 = vmatprep.subr.mxu0 0.0
  %386 = vmatpush2.msra.mxu0 0.0
  %387 = vmatprep.subr.mxu0 0.0
  %388 = vmatpush2.msra.mxu0 0.0
  %389 = vmatprep.subr.mxu0 0.0
  %390 = vmatpush2.msra.mxu0 0.0
  %391 = vmatprep.subr.mxu0 0.0
  %392 = vmatpush2.msra.mxu0 0.0
  %393 = vmatprep.subr.mxu0 0.0
  %394 = vmatpush2.msra.mxu0 0.0
  %395 = vmatprep.subr.mxu0 0.0
  %396 = vmatpush2.msra.mxu0 0.0
  %397 = vmatprep.subr.mxu0 0.0
  %398 = vmatpush2.msra.mxu0 0.0
  %399 = vmatprep.subr.mxu0 0.0
  %400 = vmatpush2.msra.mxu0 0.0
  %401 = vmatprep.subr.mxu0 0.0
  %402 = vmatpush2.msra.mxu0 0.0
  %403 = vmatprep.subr.mxu0 0.0
  %404 = vmatpush2.msra.mxu0 0.0
  %405 = vmatprep.subr.mxu0 0.0
  %406 = vmatpush2.msra.mxu0 0.0
  %407 = vmatprep.mubr.f32.mxu0 0.0
  %408 = vmatmul.mubr.f32.gmra.mxu0 %v317
  %v409 = vpop.f32.mrf.mxu0
  %v410 = vadd.f32 0.0, %v409
  %v411 = vpop.f32.mrf.mxu0
  %412 = vmatprep.mubr.f32.mxu0 0.0
  %413 = vmatmul.mubr.f32.gmra.mxu0 %v320
  %v414 = vpop.f32.mrf.mxu0
  %v415 = vadd.f32 0.0, %v414
  %v416 = vpop.f32.mrf.mxu0
  %417 = vmatprep.mubr.f32.mxu0 0.0
  %418 = vmatmul.mubr.f32.gmra.mxu0 %v323
  %v419 = vpop.f32.mrf.mxu0
  %v420 = vadd.f32 0.0, %v419
  %v421 = vpop.f32.mrf.mxu0
  %422 = vmatprep.mubr.f32.mxu0 0.0
  %423 = vmatmul.mubr.f32.gmra.mxu0 %v326
  %v424 = vpop.f32.mrf.mxu0
  %v425 = vadd.f32 0.0, %v424
  %v426 = vpop.f32.mrf.mxu0
  %427 = vmatprep.mubr.f32.mxu0 0.0
  %428 = vmatmul.mubr.f32.gmra.mxu0 %v329
  %v429 = vpop.f32.mrf.mxu0
  %v430 = vadd.f32 0.0, %v429
  %v431 = vpop.f32.mrf.mxu0
  %432 = vmatprep.mubr.f32.mxu0 0.0
  %433 = vmatmul.mubr.f32.gmra.mxu0 %v332
  %v434 = vpop.f32.mrf.mxu0
  %v435 = vadd.f32 0.0, %v434
  %v436 = vpop.f32.mrf.mxu0
  %437 = vmatprep.mubr.f32.mxu0 0.0
  %438 = vmatmul.mubr.f32.gmra.mxu0 %v335
  %v439 = vpop.f32.mrf.mxu0
  %v440 = vadd.f32 0.0, %v439
  %v441 = vpop.f32.mrf.mxu0
  %442 = vmatprep.mubr.f32.mxu0 0.0
  %443 = vmatmul.mubr.f32.gmra.mxu0 %v338
  %v444 = vpop.f32.mrf.mxu0
  %v445 = vadd.f32 0.0, %v444
  %v446 = vpop.f32.mrf.mxu0
  %447 = vmatprep.mubr.f32.mxu0 0.0
  %448 = vmatmul.mubr.f32.gmra.mxu0 %v341
  %v449 = vpop.f32.mrf.mxu0
  %v450 = vadd.f32 0.0, %v449
  %v451 = vpop.f32.mrf.mxu0
  %452 = vdwg.mxu0
  %v453 = vld [vmem:[%s4] sm:$0xff]
  %v454 = vld [vmem:[%s4 + $0x8] sm:$0xff]
  %v455 = vld [vmem:[%s4 + $0x10] sm:$0xff]
  %v456 = vld [vmem:[%s4 + $0x18] sm:$0xff]
  %v457 = vld [vmem:[%s4 + $0x20] sm:$0xff]
  %v458 = vld [vmem:[%s4 + $0x28] sm:$0xff]
  %v459 = vld [vmem:[%s4 + $0x30] sm:$0xff]
  %v460 = vld [vmem:[%s4 + $0x38] sm:$0xff]
  %v461 = vld [vmem:[%s5] sm:$0xff]
  %v462 = vld [vmem:[%s5 + $0x8] sm:$0xff]
  %v463 = vld [vmem:[%s5 + $0x10] sm:$0xff]
  %v464 = vld [vmem:[%s5 + $0x18] sm:$0xff]
  %v465 = vld [vmem:[%s5 + $0x20] sm:$0xff]
  %v466 = vld [vmem:[%s5 + $0x28] sm:$0xff]
  %v467 = vld [vmem:[%s5 + $0x30] sm:$0xff]
  %v468 = vld [vmem:[%s5 + $0x38] sm:$0xff]
  %vm469 = vcmask 261120
  %v471 = vsel %vm469, %v410, 0
  %v474 = vsel %vm469, %v415, 0
  %v477 = vsel %vm469, %v420, 0
  %v480 = vsel %vm469, %v425, 0
  %v483 = vsel %vm469, %v430, 0
  %v486 = vsel %vm469, %v435, 0
  %v489 = vsel %vm469, %v440, 0
  %v492 = vsel %vm469, %v445, 0
  %v495 = vsel %vm469, %v450, 0
  %497 = vmatprep.subr.mxu0 0.0
  %498 = vmatpush1.msra.mxu0 0.0
  %499 = vmatprep.subr.mxu0 0.0
  %500 = vmatpush1.msra.mxu0 0.0
  %501 = vmatprep.subr.mxu0 0.0
  %502 = vmatpush1.msra.mxu0 0.0
  %503 = vmatprep.subr.mxu0 0.0
  %504 = vmatpush1.msra.mxu0 0.0
  %505 = vmatprep.subr.mxu0 0.0
  %506 = vmatpush1.msra.mxu0 0.0
  %507 = vmatprep.subr.mxu0 0.0
  %508 = vmatpush1.msra.mxu0 0.0
  %509 = vmatprep.subr.mxu0 0.0
  %510 = vmatpush1.msra.mxu0 0.0
  %511 = vmatprep.subr.mxu0 0.0
  %512 = vmatpush1.msra.mxu0 0.0
  %513 = vmatprep.subr.mxu0 0.0
  %514 = vmatpush1.msra.mxu0 0.0
  %515 = vmatprep.subr.mxu0 0.0
  %516 = vmatpush1.msra.mxu0 0.0
  %517 = vmatprep.subr.mxu0 0.0
  %518 = vmatpush1.msra.mxu0 0.0
  %519 = vmatprep.subr.mxu0 0.0
  %520 = vmatpush1.msra.mxu0 0.0
  %521 = vmatprep.subr.mxu0 %v468
  %522 = vmatpush1.msra.mxu0 %v467
  %523 = vmatprep.subr.mxu0 %v466
  %524 = vmatpush1.msra.mxu0 %v465
  %525 = vmatprep.subr.mxu0 %v464
  %526 = vmatpush1.msra.mxu0 %v463
  %527 = vmatprep.subr.mxu0 %v462
  %528 = vmatpush1.msra.mxu0 %v461
  %529 = vmatprep.subr.mxu0 0.0
  %530 = vmatpush2.msra.mxu0 0.0
  %531 = vmatprep.subr.mxu0 0.0
  %532 = vmatpush2.msra.mxu0 0.0
  %533 = vmatprep.subr.mxu0 0.0
  %534 = vmatpush2.msra.mxu0 0.0
  %535 = vmatprep.subr.mxu0 0.0
  %536 = vmatpush2.msra.mxu0 0.0
  %537 = vmatprep.subr.mxu0 0.0
  %538 = vmatpush2.msra.mxu0 0.0
  %539 = vmatprep.subr.mxu0 0.0
  %540 = vmatpush2.msra.mxu0 0.0
  %541 = vmatprep.subr.mxu0 0.0
  %542 = vmatpush2.msra.mxu0 0.0
  %543 = vmatprep.subr.mxu0 0.0
  %544 = vmatpush2.msra.mxu0 0.0
  %545 = vmatprep.subr.mxu0 0.0
  %546 = vmatpush2.msra.mxu0 0.0
  %547 = vmatprep.subr.mxu0 0.0
  %548 = vmatpush2.msra.mxu0 0.0
  %549 = vmatprep.subr.mxu0 0.0
  %550 = vmatpush2.msra.mxu0 0.0
  %551 = vmatprep.subr.mxu0 0.0
  %552 = vmatpush2.msra.mxu0 0.0
  %553 = vmatprep.subr.mxu0 0.0
  %554 = vmatpush2.msra.mxu0 0.0
  %555 = vmatprep.subr.mxu0 0.0
  %556 = vmatpush2.msra.mxu0 0.0
  %557 = vmatprep.subr.mxu0 0.0
  %558 = vmatpush2.msra.mxu0 0.0
  %559 = vmatprep.subr.mxu0 0.0
  %560 = vmatpush2.msra.mxu0 0.0
  %561 = vmatprep.mubr.f32.mxu0 0.0
  %562 = vmatmul.mubr.f32.gmra.mxu0 %v471
  %v563 = vpop.f32.mrf.mxu0
  %v564 = vadd.f32 0.0, %v563
  %v565 = vpop.f32.mrf.mxu0
  %v566 = vadd.f32 0.0, %v565
  %567 = vmatprep.mubr.f32.mxu0 0.0
  %568 = vmatmul.mubr.f32.gmra.mxu0 %v474
  %v569 = vpop.f32.mrf.mxu0
  %v570 = vadd.f32 0.0, %v569
  %v571 = vpop.f32.mrf.mxu0
  %v572 = vadd.f32 0.0, %v571
  %573 = vmatprep.mubr.f32.mxu0 0.0
  %574 = vmatmul.mubr.f32.gmra.mxu0 %v477
  %v575 = vpop.f32.mrf.mxu0
  %v576 = vadd.f32 0.0, %v575
  %v577 = vpop.f32.mrf.mxu0
  %v578 = vadd.f32 0.0, %v577
  %579 = vmatprep.mubr.f32.mxu0 0.0
  %580 = vmatmul.mubr.f32.gmra.mxu0 %v480
  %v581 = vpop.f32.mrf.mxu0
  %v582 = vadd.f32 0.0, %v581
  %v583 = vpop.f32.mrf.mxu0
  %v584 = vadd.f32 0.0, %v583
  %585 = vmatprep.mubr.f32.mxu0 0.0
  %586 = vmatmul.mubr.f32.gmra.mxu0 %v483
  %v587 = vpop.f32.mrf.mxu0
  %v588 = vadd.f32 0.0, %v587
  %v589 = vpop.f32.mrf.mxu0
  %v590 = vadd.f32 0.0, %v589
  %591 = vmatprep.mubr.f32.mxu0 0.0
  %592 = vmatmul.mubr.f32.gmra.mxu0 %v486
  %v593 = vpop.f32.mrf.mxu0
  %v594 = vadd.f32 0.0, %v593
  %v595 = vpop.f32.mrf.mxu0
  %v596 = vadd.f32 0.0, %v595
  %597 = vmatprep.mubr.f32.mxu0 0.0
  %598 = vmatmul.mubr.f32.gmra.mxu0 %v489
  %v599 = vpop.f32.mrf.mxu0
  %v600 = vadd.f32 0.0, %v599
  %v601 = vpop.f32.mrf.mxu0
  %v602 = vadd.f32 0.0, %v601
  %603 = vmatprep.mubr.f32.mxu0 0.0
  %604 = vmatmul.mubr.f32.gmra.mxu0 %v492
  %v605 = vpop.f32.mrf.mxu0
  %v606 = vadd.f32 0.0, %v605
  %v607 = vpop.f32.mrf.mxu0
  %v608 = vadd.f32 0.0, %v607
  %609 = vmatprep.mubr.f32.mxu0 0.0
  %610 = vmatmul.mubr.f32.gmra.mxu0 %v495
  %v611 = vpop.f32.mrf.mxu0
  %v612 = vadd.f32 0.0, %v611
  %v613 = vpop.f32.mrf.mxu0
  %v614 = vadd.f32 0.0, %v613
  %615 = vdwg.mxu0
  %v617 = vsel %vm469, %v297, 0
  %v620 = vsel %vm469, %v298, 0
  %v623 = vsel %vm469, %v299, 0
  %v626 = vsel %vm469, %v300, 0
  %v629 = vsel %vm469, %v301, 0
  %v632 = vsel %vm469, %v302, 0
  %v635 = vsel %vm469, %v303, 0
  %v638 = vsel %vm469, %v304, 0
  %v641 = vsel %vm469, %v305, 0
  %643 = vmatprep.subr.mxu0 0.0
  %644 = vmatpush1.msra.mxu0 0.0
  %645 = vmatprep.subr.mxu0 0.0
  %646 = vmatpush1.msra.mxu0 0.0
  %647 = vmatprep.subr.mxu0 0.0
  %648 = vmatpush1.msra.mxu0 0.0
  %649 = vmatprep.subr.mxu0 0.0
  %650 = vmatpush1.msra.mxu0 0.0
  %651 = vmatprep.subr.mxu0 0.0
  %652 = vmatpush1.msra.mxu0 0.0
  %653 = vmatprep.subr.mxu0 0.0
  %654 = vmatpush1.msra.mxu0 0.0
  %655 = vmatprep.subr.mxu0 0.0
  %656 = vmatpush1.msra.mxu0 0.0
  %657 = vmatprep.subr.mxu0 0.0
  %658 = vmatpush1.msra.mxu0 0.0
  %659 = vmatprep.subr.mxu0 0.0
  %660 = vmatpush1.msra.mxu0 0.0
  %661 = vmatprep.subr.mxu0 0.0
  %662 = vmatpush1.msra.mxu0 0.0
  %663 = vmatprep.subr.mxu0 0.0
  %664 = vmatpush1.msra.mxu0 0.0
  %665 = vmatprep.subr.mxu0 0.0
  %666 = vmatpush1.msra.mxu0 0.0
  %667 = vmatprep.subr.mxu0 %v460
  %668 = vmatpush1.msra.mxu0 %v459
  %669 = vmatprep.subr.mxu0 %v458
  %670 = vmatpush1.msra.mxu0 %v457
  %671 = vmatprep.subr.mxu0 %v456
  %672 = vmatpush1.msra.mxu0 %v455
  %673 = vmatprep.subr.mxu0 %v454
  %674 = vmatpush1.msra.mxu0 %v453
  %675 = vmatprep.subr.mxu0 0.0
  %676 = vmatpush2.msra.mxu0 0.0
  %677 = vmatprep.subr.mxu0 0.0
  %678 = vmatpush2.msra.mxu0 0.0
  %679 = vmatprep.subr.mxu0 0.0
  %680 = vmatpush2.msra.mxu0 0.0
  %681 = vmatprep.subr.mxu0 0.0
  %682 = vmatpush2.msra.mxu0 0.0
  %683 = vmatprep.subr.mxu0 0.0
  %684 = vmatpush2.msra.mxu0 0.0
  %685 = vmatprep.subr.mxu0 0.0
  %686 = vmatpush2.msra.mxu0 0.0
  %687 = vmatprep.subr.mxu0 0.0
  %688 = vmatpush2.msra.mxu0 0.0
  %689 = vmatprep.subr.mxu0 0.0
  %690 = vmatpush2.msra.mxu0 0.0
  %691 = vmatprep.subr.mxu0 0.0
  %692 = vmatpush2.msra.mxu0 0.0
  %693 = vmatprep.subr.mxu0 0.0
  %694 = vmatpush2.msra.mxu0 0.0
  %695 = vmatprep.subr.mxu0 0.0
  %696 = vmatpush2.msra.mxu0 0.0
  %697 = vmatprep.subr.mxu0 0.0
  %698 = vmatpush2.msra.mxu0 0.0
  %699 = vmatprep.subr.mxu0 0.0
  %700 = vmatpush2.msra.mxu0 0.0
  %701 = vmatprep.subr.mxu0 0.0
  %702 = vmatpush2.msra.mxu0 0.0
  %703 = vmatprep.subr.mxu0 0.0
  %704 = vmatpush2.msra.mxu0 0.0
  %705 = vmatprep.subr.mxu0 0.0
  %706 = vmatpush2.msra.mxu0 0.0
  %707 = vmatprep.mubr.f32.mxu0 0.0
  %708 = vmatmul.mubr.f32.gmra.mxu0 %v617
  %v709 = vpop.f32.mrf.mxu0
  %v710 = vadd.f32 %v564, %v709
  %v711 = vpop.f32.mrf.mxu0
  %v712 = vadd.f32 %v566, %v711
  %713 = vmatprep.mubr.f32.mxu0 0.0
  %714 = vmatmul.mubr.f32.gmra.mxu0 %v620
  %v715 = vpop.f32.mrf.mxu0
  %v716 = vadd.f32 %v570, %v715
  %v717 = vpop.f32.mrf.mxu0
  %v718 = vadd.f32 %v572, %v717
  %719 = vmatprep.mubr.f32.mxu0 0.0
  %720 = vmatmul.mubr.f32.gmra.mxu0 %v623
  %v721 = vpop.f32.mrf.mxu0
  %v722 = vadd.f32 %v576, %v721
  %v723 = vpop.f32.mrf.mxu0
  %v724 = vadd.f32 %v578, %v723
  %725 = vmatprep.mubr.f32.mxu0 0.0
  %726 = vmatmul.mubr.f32.gmra.mxu0 %v626
  %v727 = vpop.f32.mrf.mxu0
  %v728 = vadd.f32 %v582, %v727
  %v729 = vpop.f32.mrf.mxu0
  %v730 = vadd.f32 %v584, %v729
  %731 = vmatprep.mubr.f32.mxu0 0.0
  %732 = vmatmul.mubr.f32.gmra.mxu0 %v629
  %v733 = vpop.f32.mrf.mxu0
  %v734 = vadd.f32 %v588, %v733
  %v735 = vpop.f32.mrf.mxu0
  %v736 = vadd.f32 %v590, %v735
  %737 = vmatprep.mubr.f32.mxu0 0.0
  %738 = vmatmul.mubr.f32.gmra.mxu0 %v632
  %v739 = vpop.f32.mrf.mxu0
  %v740 = vadd.f32 %v594, %v739
  %v741 = vpop.f32.mrf.mxu0
  %v742 = vadd.f32 %v596, %v741
  %743 = vmatprep.mubr.f32.mxu0 0.0
  %744 = vmatmul.mubr.f32.gmra.mxu0 %v635
  %v745 = vpop.f32.mrf.mxu0
  %v746 = vadd.f32 %v600, %v745
  %v747 = vpop.f32.mrf.mxu0
  %v748 = vadd.f32 %v602, %v747
  %749 = vmatprep.mubr.f32.mxu0 0.0
  %750 = vmatmul.mubr.f32.gmra.mxu0 %v638
  %v751 = vpop.f32.mrf.mxu0
  %v752 = vadd.f32 %v606, %v751
  %v753 = vpop.f32.mrf.mxu0
  %v754 = vadd.f32 %v608, %v753
  %755 = vmatprep.mubr.f32.mxu0 0.0
  %756 = vmatmul.mubr.f32.gmra.mxu0 %v641
  %v757 = vpop.f32.mrf.mxu0
  %v758 = vadd.f32 %v612, %v757
  %v759 = vpop.f32.mrf.mxu0
  %v760 = vadd.f32 %v614, %v759
  %761 = vdwg.mxu0
  %v762 = vld [vmem:[%s6] sm:$0x3]
  %v764 = vlaneseq
  %v765 = vshrl.u32 %v764, 7
  %v766 = vsub.s32 0, %v765
  %v767 = vrot.slane %v762, %v766
  %v768 = vlaneseq
  %v769 = vshrl.u32 %v768, 7
  %v770 = vsub.s32 1, %v769
  %v771 = vrot.slane %v762, %v770
  %v774 = vadd.f32 %v710, %v767
  %v775 = vadd.f32 %v712, %v771
  %v776 = vadd.f32 %v716, %v767
  %v777 = vadd.f32 %v718, %v771
  %v778 = vadd.f32 %v722, %v767
  %v779 = vadd.f32 %v724, %v771
  %v780 = vadd.f32 %v728, %v767
  %v781 = vadd.f32 %v730, %v771
  %v782 = vadd.f32 %v734, %v767
  %v783 = vadd.f32 %v736, %v771
  %v784 = vadd.f32 %v740, %v767
  %v785 = vadd.f32 %v742, %v771
  %v786 = vadd.f32 %v746, %v767
  %v787 = vadd.f32 %v748, %v771
  %v788 = vadd.f32 %v752, %v767
  %v789 = vadd.f32 %v754, %v771
  %v790 = vadd.f32 %v758, %v767
  %v791 = vadd.f32 %v760, %v771
  %792 = vst [vmem:[#allocation2] sm:$0xff] %v774
  %793 = vst [vmem:[#allocation2 + $0x8] sm:$0xff] %v775
  %794 = vst [vmem:[#allocation2 + $0x10] sm:$0xff] %v776
  %795 = vst [vmem:[#allocation2 + $0x18] sm:$0xff] %v777
  %796 = vst [vmem:[#allocation2 + $0x20] sm:$0xff] %v778
  %797 = vst [vmem:[#allocation2 + $0x28] sm:$0xff] %v779
  %798 = vst [vmem:[#allocation2 + $0x30] sm:$0xff] %v780
  %799 = vst [vmem:[#allocation2 + $0x38] sm:$0xff] %v781
  %800 = vst [vmem:[#allocation2 + $0x40] sm:$0xff] %v782
  %801 = vst [vmem:[#allocation2 + $0x48] sm:$0xff] %v783
  %802 = vst [vmem:[#allocation2 + $0x50] sm:$0xff] %v784
  %803 = vst [vmem:[#allocation2 + $0x58] sm:$0xff] %v785
  %804 = vst [vmem:[#allocation2 + $0x60] sm:$0xff] %v786
  %805 = vst [vmem:[#allocation2 + $0x68] sm:$0xff] %v787
  %806 = vst [vmem:[#allocation2 + $0x70] sm:$0xff] %v788
  %807 = vst [vmem:[#allocation2 + $0x78] sm:$0xff] %v789
  %808 = vst [vmem:[#allocation2 + $0x80] sm:$0xff] %v790
  %809 = vst [vmem:[#allocation2 + $0x88] sm:$0xff] %v791
  %v810 = vld [vmem:[%s7] sm:$0xff]
  %v811 = vld [vmem:[%s7 + $0x8] sm:$0xff]
  %v812 = vld [vmem:[%s7 + $0x10] sm:$0xff]
  %v813 = vld [vmem:[%s7 + $0x18] sm:$0xff]
  %v814 = vld [vmem:[%s7 + $0x20] sm:$0xff]
  %v815 = vld [vmem:[%s7 + $0x28] sm:$0xff]
  %v816 = vld [vmem:[%s7 + $0x30] sm:$0xff]
  %v817 = vld [vmem:[%s7 + $0x38] sm:$0xff]
  %v818 = vld [vmem:[%s7 + $0x40] sm:$0xff]
  %v819 = vld [vmem:[%s7 + $0x48] sm:$0xff]
  %v820 = vld [vmem:[%s7 + $0x50] sm:$0xff]
  %v821 = vld [vmem:[%s7 + $0x58] sm:$0xff]
  %v822 = vld [vmem:[%s7 + $0x60] sm:$0xff]
  %v823 = vld [vmem:[%s7 + $0x68] sm:$0xff]
  %v824 = vld [vmem:[%s7 + $0x70] sm:$0xff]
  %v825 = vld [vmem:[%s7 + $0x78] sm:$0xff]
  loop: start=0, step=1, limit=9
  $region58: #{deepfamq_forward.1} parent=0 // loop_pre_header
    _
  $region59: #{deepfamq_forward.1} parent=0 // loop_header
    %s827 = sphi 0, %s831
    %p828 = scmp.ge.s32.totalorder %s827, 9
    %v832 = vphi 0.0, %v1275
    %v833 = vphi 0.0, %v1273
  $region60: #{deepfamq_forward.1} parent=0 // loop_header_branch
    %830 = sbr.rel (%p828) target = $region64
  $region61: #{deepfamq_forward.1} parent=0 // loop_body
    %s834 = smul.u32 %s827, 8
    %s835 = sshra.s32 %s834, 3
    %s836 = sand.u32 %s834, 7
    %s837 = smul.u32 %s835, 2
    %s838 = smul.addr %s837, 8
    %s839 = scalar_lea.vmem [#allocation2], %s838
    %v840 = vld [vmem:[%s839] sm:$0xff]
    %v841 = vld [vmem:[%s839 + $0x8] sm:$0xff]
    %v843 = vrot.slane %v832, 6
    %844 = vrot.lane.b32.xlu0 %v843, 64
    %v845 = vpop.permute.xlu0 %844
    %vm846 = vcmask 523264
    %v847 = vsel %vm846, %v845, 0
    %849 = vmatprep.subr.mxu0 0.0
    %850 = vmatpush1.msra.mxu0 0.0
    %851 = vmatprep.subr.mxu0 0.0
    %852 = vmatpush1.msra.mxu0 0.0
    %853 = vmatprep.subr.mxu0 0.0
    %854 = vmatpush1.msra.mxu0 0.0
    %855 = vmatprep.subr.mxu0 0.0
    %856 = vmatpush1.msra.mxu0 0.0
    %857 = vmatprep.subr.mxu0 0.0
    %858 = vmatpush1.msra.mxu0 0.0
    %859 = vmatprep.subr.mxu0 0.0
    %860 = vmatpush1.msra.mxu0 0.0
    %861 = vmatprep.subr.mxu0 0.0
    %862 = vmatpush1.msra.mxu0 0.0
    %863 = vmatprep.subr.mxu0 0.0
    %864 = vmatpush1.msra.mxu0 0.0
    %865 = vmatprep.subr.mxu0 %v825
    %866 = vmatpush1.msra.mxu0 %v824
    %867 = vmatprep.subr.mxu0 %v823
    %868 = vmatpush1.msra.mxu0 %v822
    %869 = vmatprep.subr.mxu0 %v821
    %870 = vmatpush1.msra.mxu0 %v820
    %871 = vmatprep.subr.mxu0 %v819
    %872 = vmatpush1.msra.mxu0 %v818
    %873 = vmatprep.subr.mxu0 %v817
    %874 = vmatpush1.msra.mxu0 %v816
    %875 = vmatprep.subr.mxu0 %v815
    %876 = vmatpush1.msra.mxu0 %v814
    %877 = vmatprep.subr.mxu0 %v813
    %878 = vmatpush1.msra.mxu0 %v812
    %879 = vmatprep.subr.mxu0 %v811
    %880 = vmatpush1.msra.mxu0 %v810
    %881 = vmatprep.subr.mxu0 0.0
    %882 = vmatpush2.msra.mxu0 0.0
    %883 = vmatprep.subr.mxu0 0.0
    %884 = vmatpush2.msra.mxu0 0.0
    %885 = vmatprep.subr.mxu0 0.0
    %886 = vmatpush2.msra.mxu0 0.0
    %887 = vmatprep.subr.mxu0 0.0
    %888 = vmatpush2.msra.mxu0 0.0
    %889 = vmatprep.subr.mxu0 0.0
    %890 = vmatpush2.msra.mxu0 0.0
    %891 = vmatprep.subr.mxu0 0.0
    %892 = vmatpush2.msra.mxu0 0.0
    %893 = vmatprep.subr.mxu0 0.0
    %894 = vmatpush2.msra.mxu0 0.0
    %895 = vmatprep.subr.mxu0 0.0
    %896 = vmatpush2.msra.mxu0 0.0
    %897 = vmatprep.subr.mxu0 0.0
    %898 = vmatpush2.msra.mxu0 0.0
    %899 = vmatprep.subr.mxu0 0.0
    %900 = vmatpush2.msra.mxu0 0.0
    %901 = vmatprep.subr.mxu0 0.0
    %902 = vmatpush2.msra.mxu0 0.0
    %903 = vmatprep.subr.mxu0 0.0
    %904 = vmatpush2.msra.mxu0 0.0
    %905 = vmatprep.subr.mxu0 0.0
    %906 = vmatpush2.msra.mxu0 0.0
    %907 = vmatprep.subr.mxu0 0.0
    %908 = vmatpush2.msra.mxu0 0.0
    %909 = vmatprep.subr.mxu0 0.0
    %910 = vmatpush2.msra.mxu0 0.0
    %911 = vmatprep.subr.mxu0 0.0
    %912 = vmatpush2.msra.mxu0 0.0
    %913 = vmatprep.mubr.f32.mxu0 0.0
    %914 = vmatmul.mubr.f32.gmra.mxu0 %v847
    %v915 = vpop.f32.mrf.mxu0
    %v916 = vadd.f32 0.0, %v915
    %v917 = vpop.f32.mrf.mxu0
    %v918 = vadd.f32 0.0, %v917
    %919 = vdwg.mxu0
    %v920 = vadd.f32 %v840, %v916
    %v921 = vadd.f32 %v841, %v918
    %v922 = vsub.f32 0.0, %v920
    %v923 = vmul.f32 %v922, 1.442695
    %v924 = vpow.pop %v923
    %v925 = vadd.f32 %v924, 1.0
    %v926 = vrcp.pop %v925
    %v927 = vmul.f32 1.0, %v926
    %v928 = vtanh.pop %v921
    %v929 = vsub.f32 0.0, %v921
    %v930 = vmul.f32 %v929, 1.442695
    %v931 = vpow.pop %v930
    %v932 = vadd.f32 %v931, 1.0
    %v933 = vrcp.pop %v932
    %v934 = vmul.f32 1.0, %v933
    %v936 = vrot.slane %v833, 6
    %v938 = vmul.f32 %v927, %v936
    %v939 = vmul.f32 %v927, %v928
    %941 = vrot.lane.b32.xlu0 %v939, 64
    %v942 = vpop.permute.xlu0 %941
    %v944 = vadd.f32 %v938, %v942
    %v945 = vtanh.pop %v944
    %v946 = vmul.f32 %v934, %v945
    %948 = vrot.lane.b32.xlu0 %v946, 64
    %v949 = vpop.permute.xlu0 %948
    %v950 = vsel %vm846, %v949, 0
    %952 = vmatprep.subr.mxu0 0.0
    %953 = vmatpush1.msra.mxu0 0.0
    %954 = vmatprep.subr.mxu0 0.0
    %955 = vmatpush1.msra.mxu0 0.0
    %956 = vmatprep.subr.mxu0 0.0
    %957 = vmatpush1.msra.mxu0 0.0
    %958 = vmatprep.subr.mxu0 0.0
    %959 = vmatpush1.msra.mxu0 0.0
    %960 = vmatprep.subr.mxu0 0.0
    %961 = vmatpush1.msra.mxu0 0.0
    %962 = vmatprep.subr.mxu0 0.0
    %963 = vmatpush1.msra.mxu0 0.0
    %964 = vmatprep.subr.mxu0 0.0
    %965 = vmatpush1.msra.mxu0 0.0
    %966 = vmatprep.subr.mxu0 0.0
    %967 = vmatpush1.msra.mxu0 0.0
    %968 = vmatprep.subr.mxu0 %v825
    %969 = vmatpush1.msra.mxu0 %v824
    %970 = vmatprep.subr.mxu0 %v823
    %971 = vmatpush1.msra.mxu0 %v822
    %972 = vmatprep.subr.mxu0 %v821
    %973 = vmatpush1.msra.mxu0 %v820
    %974 = vmatprep.subr.mxu0 %v819
    %975 = vmatpush1.msra.mxu0 %v818
    %976 = vmatprep.subr.mxu0 %v817
    %977 = vmatpush1.msra.mxu0 %v816
    %978 = vmatprep.subr.mxu0 %v815
    %979 = vmatpush1.msra.mxu0 %v814
    %980 = vmatprep.subr.mxu0 %v813
    %981 = vmatpush1.msra.mxu0 %v812
    %982 = vmatprep.subr.mxu0 %v811
    %983 = vmatpush1.msra.mxu0 %v810
    %984 = vmatprep.subr.mxu0 0.0
    %985 = vmatpush2.msra.mxu0 0.0
    %986 = vmatprep.subr.mxu0 0.0
    %987 = vmatpush2.msra.mxu0 0.0
    %988 = vmatprep.subr.mxu0 0.0
    %989 = vmatpush2.msra.mxu0 0.0
    %990 = vmatprep.subr.mxu0 0.0
    %991 = vmatpush2.msra.mxu0 0.0
    %992 = vmatprep.subr.mxu0 0.0
    %993 = vmatpush2.msra.mxu0 0.0
    %994 = vmatprep.subr.mxu0 0.0
    %995 = vmatpush2.msra.mxu0 0.0
    %996 = vmatprep.subr.mxu0 0.0
    %997 = vmatpush2.msra.mxu0 0.0
    %998 = vmatprep.subr.mxu0 0.0
    %999 = vmatpush2.msra.mxu0 0.0
    %1000 = vmatprep.subr.mxu0 0.0
    %1001 = vmatpush2.msra.mxu0 0.0
    %1002 = vmatprep.subr.mxu0 0.0
    %1003 = vmatpush2.msra.mxu0 0.0
    %1004 = vmatprep.subr.mxu0 0.0
    %1005 = vmatpush2.msra.mxu0 0.0
    %1006 = vmatprep.subr.mxu0 0.0
    %1007 = vmatpush2.msra.mxu0 0.0
    %1008 = vmatprep.subr.mxu0 0.0
    %1009 = vmatpush2.msra.mxu0 0.0
    %1010 = vmatprep.subr.mxu0 0.0
    %1011 = vmatpush2.msra.mxu0 0.0
    %1012 = vmatprep.subr.mxu0 0.0
    %1013 = vmatpush2.msra.mxu0 0.0
    %1014 = vmatprep.subr.mxu0 0.0
    %1015 = vmatpush2.msra.mxu0 0.0
    %1016 = vmatprep.mubr.f32.mxu0 0.0
    %1017 = vmatmul.mubr.f32.gmra.mxu0 %v950
    %v1018 = vpop.f32.mrf.mxu0
    %v1019 = vadd.f32 0.0, %v1018
    %v1020 = vpop.f32.mrf.mxu0
    %v1021 = vadd.f32 0.0, %v1020
    %1022 = vdwg.mxu0
    %v1025 = vrot.slane %v1019, 6
    %v1026 = vrot.slane %v1021, 6
    %v1029 = vadd.f32 %v840, %v1025
    %v1030 = vadd.f32 %v841, %v1026
    %v1031 = vsub.f32 0.0, %v1029
    %v1032 = vmul.f32 %v1031, 1.442695
    %v1033 = vpow.pop %v1032
    %v1034 = vadd.f32 %v1033, 1.0
    %v1035 = vrcp.pop %v1034
    %v1036 = vmul.f32 1.0, %v1035
    %v1037 = vtanh.pop %v1030
    %v1038 = vsub.f32 0.0, %v1030
    %v1039 = vmul.f32 %v1038, 1.442695
    %v1040 = vpow.pop %v1039
    %v1041 = vadd.f32 %v1040, 1.0
    %v1042 = vrcp.pop %v1041
    %v1043 = vmul.f32 1.0, %v1042
    %v1045 = vrot.slane %v944, 6
    %v1047 = vmul.f32 %v1036, %v1045
    %v1048 = vmul.f32 %v1036, %v1037
    %1050 = vrot.lane.b32.xlu0 %v1048, 64
    %v1051 = vpop.permute.xlu0 %1050
    %v1053 = vadd.f32 %v1047, %v1051
    %v1054 = vtanh.pop %v1053
    %v1055 = vmul.f32 %v1043, %v1054
    %v1057 = vrot.slane %v1055, 2
    %1058 = vrot.lane.b32.xlu0 %v1057, 64
    %v1059 = vpop.permute.xlu0 %1058
    %v1060 = vsel %vm846, %v1059, 0
    %1062 = vmatprep.subr.mxu0 0.0
    %1063 = vmatpush1.msra.mxu0 0.0
    %1064 = vmatprep.subr.mxu0 0.0
    %1065 = vmatpush1.msra.mxu0 0.0
    %1066 = vmatprep.subr.mxu0 0.0
    %1067 = vmatpush1.msra.mxu0 0.0
    %1068 = vmatprep.subr.mxu0 0.0
    %1069 = vmatpush1.msra.mxu0 0.0
    %1070 = vmatprep.subr.mxu0 0.0
    %1071 = vmatpush1.msra.mxu0 0.0
    %1072 = vmatprep.subr.mxu0 0.0
    %1073 = vmatpush1.msra.mxu0 0.0
    %1074 = vmatprep.subr.mxu0 0.0
    %1075 = vmatpush1.msra.mxu0 0.0
    %1076 = vmatprep.subr.mxu0 0.0
    %1077 = vmatpush1.msra.mxu0 0.0
    %1078 = vmatprep.subr.mxu0 %v825
    %1079 = vmatpush1.msra.mxu0 %v824
    %1080 = vmatprep.subr.mxu0 %v823
    %1081 = vmatpush1.msra.mxu0 %v822
    %1082 = vmatprep.subr.mxu0 %v821
    %1083 = vmatpush1.msra.mxu0 %v820
    %1084 = vmatprep.subr.mxu0 %v819
    %1085 = vmatpush1.msra.mxu0 %v818
    %1086 = vmatprep.subr.mxu0 %v817
    %1087 = vmatpush1.msra.mxu0 %v816
    %1088 = vmatprep.subr.mxu0 %v815
    %1089 = vmatpush1.msra.mxu0 %v814
    %1090 = vmatprep.subr.mxu0 %v813
    %1091 = vmatpush1.msra.mxu0 %v812
    %1092 = vmatprep.subr.mxu0 %v811
    %1093 = vmatpush1.msra.mxu0 %v810
    %1094 = vmatprep.subr.mxu0 0.0
    %1095 = vmatpush2.msra.mxu0 0.0
    %1096 = vmatprep.subr.mxu0 0.0
    %1097 = vmatpush2.msra.mxu0 0.0
    %1098 = vmatprep.subr.mxu0 0.0
    %1099 = vmatpush2.msra.mxu0 0.0
    %1100 = vmatprep.subr.mxu0 0.0
    %1101 = vmatpush2.msra.mxu0 0.0
    %1102 = vmatprep.subr.mxu0 0.0
    %1103 = vmatpush2.msra.mxu0 0.0
    %1104 = vmatprep.subr.mxu0 0.0
    %1105 = vmatpush2.msra.mxu0 0.0
    %1106 = vmatprep.subr.mxu0 0.0
    %1107 = vmatpush2.msra.mxu0 0.0
    %1108 = vmatprep.subr.mxu0 0.0
    %1109 = vmatpush2.msra.mxu0 0.0
    %1110 = vmatprep.subr.mxu0 0.0
    %1111 = vmatpush2.msra.mxu0 0.0
    %1112 = vmatprep.subr.mxu0 0.0
    %1113 = vmatpush2.msra.mxu0 0.0
    %1114 = vmatprep.subr.mxu0 0.0
    %1115 = vmatpush2.msra.mxu0 0.0
    %1116 = vmatprep.subr.mxu0 0.0
    %1117 = vmatpush2.msra.mxu0 0.0
    %1118 = vmatprep.subr.mxu0 0.0
    %1119 = vmatpush2.msra.mxu0 0.0
    %1120 = vmatprep.subr.mxu0 0.0
    %1121 = vmatpush2.msra.mxu0 0.0
    %1122 = vmatprep.subr.mxu0 0.0
    %1123 = vmatpush2.msra.mxu0 0.0
    %1124 = vmatprep.subr.mxu0 0.0
    %1125 = vmatpush2.msra.mxu0 0.0
    %1126 = vmatprep.mubr.f32.mxu0 0.0
    %1127 = vmatmul.mubr.f32.gmra.mxu0 %v1060
    %v1128 = vpop.f32.mrf.mxu0
    %v1129 = vadd.f32 0.0, %v1128
    %v1130 = vpop.f32.mrf.mxu0
    %v1131 = vadd.f32 0.0, %v1130
    %1132 = vdwg.mxu0
    %v1135 = vrot.slane %v1129, 4
    %v1136 = vrot.slane %v1131, 4
    %v1139 = vadd.f32 %v840, %v1135
    %v1140 = vadd.f32 %v841, %v1136
    %v1141 = vsub.f32 0.0, %v1139
    %v1142 = vmul.f32 %v1141, 1.442695
    %v1143 = vpow.pop %v1142
    %v1144 = vadd.f32 %v1143, 1.0
    %v1145 = vrcp.pop %v1144
    %v1146 = vmul.f32 1.0, %v1145
    %v1147 = vtanh.pop %v1140
    %v1148 = vsub.f32 0.0, %v1140
    %v1149 = vmul.f32 %v1148, 1.442695
    %v1150 = vpow.pop %v1149
    %v1151 = vadd.f32 %v1150, 1.0
    %v1152 = vrcp.pop %v1151
    %v1153 = vmul.f32 1.0, %v1152
    %v1155 = vrot.slane %v1053, 6
    %v1157 = vmul.f32 %v1146, %v1155
    %v1158 = vmul.f32 %v1146, %v1147
    %1160 = vrot.lane.b32.xlu0 %v1158, 64
    %v1161 = vpop.permute.xlu0 %1160
    %v1163 = vadd.f32 %v1157, %v1161
    %v1164 = vtanh.pop %v1163
    %v1165 = vmul.f32 %v1153, %v1164
    %v1167 = vrot.slane %v1165, 4
    %1168 = vrot.lane.b32.xlu0 %v1167, 64
    %v1169 = vpop.permute.xlu0 %1168
    %v1170 = vsel %vm846, %v1169, 0
    %1172 = vmatprep.subr.mxu0 0.0
    %1173 = vmatpush1.msra.mxu0 0.0
    %1174 = vmatprep.subr.mxu0 0.0
    %1175 = vmatpush1.msra.mxu0 0.0
    %1176 = vmatprep.subr.mxu0 0.0
    %1177 = vmatpush1.msra.mxu0 0.0
    %1178 = vmatprep.subr.mxu0 0.0
    %1179 = vmatpush1.msra.mxu0 0.0
    %1180 = vmatprep.subr.mxu0 0.0
    %1181 = vmatpush1.msra.mxu0 0.0
    %1182 = vmatprep.subr.mxu0 0.0
    %1183 = vmatpush1.msra.mxu0 0.0
    %1184 = vmatprep.subr.mxu0 0.0
    %1185 = vmatpush1.msra.mxu0 0.0
    %1186 = vmatprep.subr.mxu0 0.0
    %1187 = vmatpush1.msra.mxu0 0.0
    %1188 = vmatprep.subr.mxu0 %v825
    %1189 = vmatpush1.msra.mxu0 %v824
    %1190 = vmatprep.subr.mxu0 %v823
    %1191 = vmatpush1.msra.mxu0 %v822
    %1192 = vmatprep.subr.mxu0 %v821
    %1193 = vmatpush1.msra.mxu0 %v820
    %1194 = vmatprep.subr.mxu0 %v819
    %1195 = vmatpush1.msra.mxu0 %v818
    %1196 = vmatprep.subr.mxu0 %v817
    %1197 = vmatpush1.msra.mxu0 %v816
    %1198 = vmatprep.subr.mxu0 %v815
    %1199 = vmatpush1.msra.mxu0 %v814
    %1200 = vmatprep.subr.mxu0 %v813
    %1201 = vmatpush1.msra.mxu0 %v812
    %1202 = vmatprep.subr.mxu0 %v811
    %1203 = vmatpush1.msra.mxu0 %v810
    %1204 = vmatprep.subr.mxu0 0.0
    %1205 = vmatpush2.msra.mxu0 0.0
    %1206 = vmatprep.subr.mxu0 0.0
    %1207 = vmatpush2.msra.mxu0 0.0
    %1208 = vmatprep.subr.mxu0 0.0
    %1209 = vmatpush2.msra.mxu0 0.0
    %1210 = vmatprep.subr.mxu0 0.0
    %1211 = vmatpush2.msra.mxu0 0.0
    %1212 = vmatprep.subr.mxu0 0.0
    %1213 = vmatpush2.msra.mxu0 0.0
    %1214 = vmatprep.subr.mxu0 0.0
    %1215 = vmatpush2.msra.mxu0 0.0
    %1216 = vmatprep.subr.mxu0 0.0
    %1217 = vmatpush2.msra.mxu0 0.0
    %1218 = vmatprep.subr.mxu0 0.0
    %1219 = vmatpush2.msra.mxu0 0.0
    %1220 = vmatprep.subr.mxu0 0.0
    %1221 = vmatpush2.msra.mxu0 0.0
    %1222 = vmatprep.subr.mxu0 0.0
    %1223 = vmatpush2.msra.mxu0 0.0
    %1224 = vmatprep.subr.mxu0 0.0
    %1225 = vmatpush2.msra.mxu0 0.0
    %1226 = vmatprep.subr.mxu0 0.0
    %1227 = vmatpush2.msra.mxu0 0.0
    %1228 = vmatprep.subr.mxu0 0.0
    %1229 = vmatpush2.msra.mxu0 0.0
    %1230 = vmatprep.subr.mxu0 0.0
    %1231 = vmatpush2.msra.mxu0 0.0
    %1232 = vmatprep.subr.mxu0 0.0
    %1233 = vmatpush2.msra.mxu0 0.0
    %1234 = vmatprep.subr.mxu0 0.0
    %1235 = vmatpush2.msra.mxu0 0.0
    %1236 = vmatprep.mubr.f32.mxu0 0.0
    %1237 = vmatmul.mubr.f32.gmra.mxu0 %v1170
    %v1238 = vpop.f32.mrf.mxu0
    %v1239 = vadd.f32 0.0, %v1238
    %v1240 = vpop.f32.mrf.mxu0
    %v1241 = vadd.f32 0.0, %v1240
    %1242 = vdwg.mxu0
    %v1245 = vrot.slane %v1239, 2
    %v1246 = vrot.slane %v1241, 2
    %v1249 = vadd.f32 %v840, %v1245
    %v1250 = vadd.f32 %v841, %v1246
    %v1251 = vsub.f32 0.0, %v1249
    %v1252 = vmul.f32 %v1251, 1.442695
    %v1253 = vpow.pop %v1252
    %v1254 = vadd.f32 %v1253, 1.0
    %v1255 = vrcp.pop %v1254
    %v1256 = vmul.f32 1.0, %v1255
    %v1257 = vtanh.pop %v1250
    %v1258 = vsub.f32 0.0, %v1250
    %v1259 = vmul.f32 %v1258, 1.442695
    %v1260 = vpow.pop %v1259
    %v1261 = vadd.f32 %v1260, 1.0
    %v1262 = vrcp.pop %v1261
    %v1263 = vmul.f32 1.0, %v1262
    %v1265 = vrot.slane %v1163, 6
    %v1267 = vmul.f32 %v1256, %v1265
    %v1268 = vmul.f32 %v1256, %v1257
    %1270 = vrot.lane.b32.xlu0 %v1268, 64
    %v1271 = vpop.permute.xlu0 %1270
    %v1273 = vadd.f32 %v1267, %v1271
    %v1274 = vtanh.pop %v1273
    %v1275 = vmul.f32 %v1263, %v1274
    %vm1276 = vcmask 1041408
    %v1277 = vsel %vm1276, %v946, %v1055
    %v1278 = vsel %vm102, %v1277, %v1165
    %vm1279 = vcmask 1045504
    %v1280 = vsel %vm1279, %v1278, %v1275
    %1282 = vrot.lane.b32.xlu0 %v1280, 64
    %v1283 = vpop.permute.xlu0 %1282
    %s1285 = scalar_lea.vmem [#allocation3], %s834
    %1286 = vst.msk [vmem:[%s1285] sm:$0xff] %vm846, %v1283
  $region62: #{deepfamq_forward.1} parent=0 // loop_footer
    %s831 = sadd.s32 1, %s827
  $region63: #{deepfamq_forward.1} parent=0 // loop_footer_branch
    %826 = sbr.rel target = $region59
  $region64: #{deepfamq_forward.1} parent=0 // loop_exit
    _
  loop: start=0, step=1, limit=9
  $region65: #{deepfamq_forward.1} parent=0 // loop_pre_header
    _
  $region66: #{deepfamq_forward.1} parent=0 // loop_header
    %s1288 = sphi 0, %s1292
    %p1289 = scmp.ge.s32.totalorder %s1288, 9
    %v1293 = vphi 0.0, %v1637
  $region67: #{deepfamq_forward.1} parent=0 // loop_header_branch
    %1291 = sbr.rel (%p1289) target = $region71
  $region68: #{deepfamq_forward.1} parent=0 // loop_body
    %s1294 = smul.u32 %s1288, 8
    %s1295 = scalar_lea.vmem [#allocation3], %s1294
    %v1296 = vld [vmem:[%s1295] sm:$0xff]
    %s1297 = smul.u32 %s1288, 4
    %s1298 = smul.u32 %s1297, 64
    %s1299 = scalar_lea.vmem %s8, %s1298
    %v1300 = vld [vmem:[%s1299] sm:$0xff]
    %v1301 = vld [vmem:[%s1299 + $0x8] sm:$0xff]
    %v1302 = vld [vmem:[%s1299 + $0x10] sm:$0xff]
    %v1303 = vld [vmem:[%s1299 + $0x18] sm:$0xff]
    %v1304 = vld [vmem:[%s1299 + $0x20] sm:$0xff]
    %v1305 = vld [vmem:[%s1299 + $0x28] sm:$0xff]
    %v1306 = vld [vmem:[%s1299 + $0x30] sm:$0xff]
    %v1307 = vld [vmem:[%s1299 + $0x38] sm:$0xff]
    %vm1308 = vcmask 523264
    %v1310 = vsel %vm1308, %v1296, 0
    %1312 = vmatprep.subr.mxu0 0.0
    %1313 = vmatpush1.msra.mxu0 0.0
    %1314 = vmatprep.subr.mxu0 0.0
    %1315 = vmatpush1.msra.mxu0 0.0
    %1316 = vmatprep.subr.mxu0 0.0
    %1317 = vmatpush1.msra.mxu0 0.0
    %1318 = vmatprep.subr.mxu0 0.0
    %1319 = vmatpush1.msra.mxu0 0.0
    %1320 = vmatprep.subr.mxu0 0.0
    %1321 = vmatpush1.msra.mxu0 0.0
    %1322 = vmatprep.subr.mxu0 0.0
    %1323 = vmatpush1.msra.mxu0 0.0
    %1324 = vmatprep.subr.mxu0 0.0
    %1325 = vmatpush1.msra.mxu0 0.0
    %1326 = vmatprep.subr.mxu0 0.0
    %1327 = vmatpush1.msra.mxu0 0.0
    %1328 = vmatprep.subr.mxu0 0.0
    %1329 = vmatpush1.msra.mxu0 %v1307
    %1330 = vmatprep.subr.mxu0 0.0
    %1331 = vmatpush1.msra.mxu0 %v1306
    %1332 = vmatprep.subr.mxu0 0.0
    %1333 = vmatpush1.msra.mxu0 %v1305
    %1334 = vmatprep.subr.mxu0 0.0
    %1335 = vmatpush1.msra.mxu0 %v1304
    %1336 = vmatprep.subr.mxu0 0.0
    %1337 = vmatpush1.msra.mxu0 %v1303
    %1338 = vmatprep.subr.mxu0 0.0
    %1339 = vmatpush1.msra.mxu0 %v1302
    %1340 = vmatprep.subr.mxu0 0.0
    %1341 = vmatpush1.msra.mxu0 %v1301
    %1342 = vmatprep.subr.mxu0 0.0
    %1343 = vmatpush1.msra.mxu0 %v1300
    %1344 = vmatprep.subr.mxu0 0.0
    %1345 = vmatpush2.msra.mxu0 0.0
    %1346 = vmatprep.subr.mxu0 0.0
    %1347 = vmatpush2.msra.mxu0 0.0
    %1348 = vmatprep.subr.mxu0 0.0
    %1349 = vmatpush2.msra.mxu0 0.0
    %1350 = vmatprep.subr.mxu0 0.0
    %1351 = vmatpush2.msra.mxu0 0.0
    %1352 = vmatprep.subr.mxu0 0.0
    %1353 = vmatpush2.msra.mxu0 0.0
    %1354 = vmatprep.subr.mxu0 0.0
    %1355 = vmatpush2.msra.mxu0 0.0
    %1356 = vmatprep.subr.mxu0 0.0
    %1357 = vmatpush2.msra.mxu0 0.0
    %1358 = vmatprep.subr.mxu0 0.0
    %1359 = vmatpush2.msra.mxu0 0.0
    %1360 = vmatprep.subr.mxu0 0.0
    %1361 = vmatpush2.msra.mxu0 0.0
    %1362 = vmatprep.subr.mxu0 0.0
    %1363 = vmatpush2.msra.mxu0 0.0
    %1364 = vmatprep.subr.mxu0 0.0
    %1365 = vmatpush2.msra.mxu0 0.0
    %1366 = vmatprep.subr.mxu0 0.0
    %1367 = vmatpush2.msra.mxu0 0.0
    %1368 = vmatprep.subr.mxu0 0.0
    %1369 = vmatpush2.msra.mxu0 0.0
    %1370 = vmatprep.subr.mxu0 0.0
    %1371 = vmatpush2.msra.mxu0 0.0
    %1372 = vmatprep.subr.mxu0 0.0
    %1373 = vmatpush2.msra.mxu0 0.0
    %1374 = vmatprep.subr.mxu0 0.0
    %1375 = vmatpush2.msra.mxu0 0.0
    %1376 = vmatprep.mubr.f32.mxu0 0.0
    %1377 = vmatmul.mubr.f32.gmra.mxu0 %v1310
    %v1378 = vpop.f32.mrf.mxu0
    %v1379 = vadd.f32 0.0, %v1378
    %v1380 = vpop.f32.mrf.mxu0
    %1381 = vdwg.mxu0
    %v1382 = vadd.f32 %v1293, %v1379
    %s1383 = sadd.s32 %s1297, 1
    %s1384 = smul.u32 %s1383, 64
    %s1385 = scalar_lea.vmem %s8, %s1384
    %v1386 = vld [vmem:[%s1385] sm:$0xff]
    %v1387 = vld [vmem:[%s1385 + $0x8] sm:$0xff]
    %v1388 = vld [vmem:[%s1385 + $0x10] sm:$0xff]
    %v1389 = vld [vmem:[%s1385 + $0x18] sm:$0xff]
    %v1390 = vld [vmem:[%s1385 + $0x20] sm:$0xff]
    %v1391 = vld [vmem:[%s1385 + $0x28] sm:$0xff]
    %v1392 = vld [vmem:[%s1385 + $0x30] sm:$0xff]
    %v1393 = vld [vmem:[%s1385 + $0x38] sm:$0xff]
    %v1394 = vrot.slane %v1296, 2
    %v1395 = vsel %vm1308, %v1394, 0
    %1397 = vmatprep.subr.mxu0 0.0
    %1398 = vmatpush1.msra.mxu0 0.0
    %1399 = vmatprep.subr.mxu0 0.0
    %1400 = vmatpush1.msra.mxu0 0.0
    %1401 = vmatprep.subr.mxu0 0.0
    %1402 = vmatpush1.msra.mxu0 0.0
    %1403 = vmatprep.subr.mxu0 0.0
    %1404 = vmatpush1.msra.mxu0 0.0
    %1405 = vmatprep.subr.mxu0 0.0
    %1406 = vmatpush1.msra.mxu0 0.0
    %1407 = vmatprep.subr.mxu0 0.0
    %1408 = vmatpush1.msra.mxu0 0.0
    %1409 = vmatprep.subr.mxu0 0.0
    %1410 = vmatpush1.msra.mxu0 0.0
    %1411 = vmatprep.subr.mxu0 0.0
    %1412 = vmatpush1.msra.mxu0 0.0
    %1413 = vmatprep.subr.mxu0 0.0
    %1414 = vmatpush1.msra.mxu0 %v1393
    %1415 = vmatprep.subr.mxu0 0.0
    %1416 = vmatpush1.msra.mxu0 %v1392
    %1417 = vmatprep.subr.mxu0 0.0
    %1418 = vmatpush1.msra.mxu0 %v1391
    %1419 = vmatprep.subr.mxu0 0.0
    %1420 = vmatpush1.msra.mxu0 %v1390
    %1421 = vmatprep.subr.mxu0 0.0
    %1422 = vmatpush1.msra.mxu0 %v1389
    %1423 = vmatprep.subr.mxu0 0.0
    %1424 = vmatpush1.msra.mxu0 %v1388
    %1425 = vmatprep.subr.mxu0 0.0
    %1426 = vmatpush1.msra.mxu0 %v1387
    %1427 = vmatprep.subr.mxu0 0.0
    %1428 = vmatpush1.msra.mxu0 %v1386
    %1429 = vmatprep.subr.mxu0 0.0
    %1430 = vmatpush2.msra.mxu0 0.0
    %1431 = vmatprep.subr.mxu0 0.0
    %1432 = vmatpush2.msra.mxu0 0.0
    %1433 = vmatprep.subr.mxu0 0.0
    %1434 = vmatpush2.msra.mxu0 0.0
    %1435 = vmatprep.subr.mxu0 0.0
    %1436 = vmatpush2.msra.mxu0 0.0
    %1437 = vmatprep.subr.mxu0 0.0
    %1438 = vmatpush2.msra.mxu0 0.0
    %1439 = vmatprep.subr.mxu0 0.0
    %1440 = vmatpush2.msra.mxu0 0.0
    %1441 = vmatprep.subr.mxu0 0.0
    %1442 = vmatpush2.msra.mxu0 0.0
    %1443 = vmatprep.subr.mxu0 0.0
    %1444 = vmatpush2.msra.mxu0 0.0
    %1445 = vmatprep.subr.mxu0 0.0
    %1446 = vmatpush2.msra.mxu0 0.0
    %1447 = vmatprep.subr.mxu0 0.0
    %1448 = vmatpush2.msra.mxu0 0.0
    %1449 = vmatprep.subr.mxu0 0.0
    %1450 = vmatpush2.msra.mxu0 0.0
    %1451 = vmatprep.subr.mxu0 0.0
    %1452 = vmatpush2.msra.mxu0 0.0
    %1453 = vmatprep.subr.mxu0 0.0
    %1454 = vmatpush2.msra.mxu0 0.0
    %1455 = vmatprep.subr.mxu0 0.0
    %1456 = vmatpush2.msra.mxu0 0.0
    %1457 = vmatprep.subr.mxu0 0.0
    %1458 = vmatpush2.msra.mxu0 0.0
    %1459 = vmatprep.subr.mxu0 0.0
    %1460 = vmatpush2.msra.mxu0 0.0
    %1461 = vmatprep.mubr.f32.mxu0 0.0
    %1462 = vmatmul.mubr.f32.gmra.mxu0 %v1395
    %v1463 = vpop.f32.mrf.mxu0
    %v1464 = vadd.f32 0.0, %v1463
    %v1465 = vpop.f32.mrf.mxu0
    %1466 = vdwg.mxu0
    %v1467 = vadd.f32 %v1382, %v1464
    %s1468 = sadd.s32 %s1297, 2
    %s1469 = smul.u32 %s1468, 64
    %s1470 = scalar_lea.vmem %s8, %s1469
    %v1471 = vld [vmem:[%s1470] sm:$0xff]
    %v1472 = vld [vmem:[%s1470 + $0x8] sm:$0xff]
    %v1473 = vld [vmem:[%s1470 + $0x10] sm:$0xff]
    %v1474 = vld [vmem:[%s1470 + $0x18] sm:$0xff]
    %v1475 = vld [vmem:[%s1470 + $0x20] sm:$0xff]
    %v1476 = vld [vmem:[%s1470 + $0x28] sm:$0xff]
    %v1477 = vld [vmem:[%s1470 + $0x30] sm:$0xff]
    %v1478 = vld [vmem:[%s1470 + $0x38] sm:$0xff]
    %v1479 = vrot.slane %v1296, 4
    %v1480 = vsel %vm1308, %v1479, 0
    %1482 = vmatprep.subr.mxu0 0.0
    %1483 = vmatpush1.msra.mxu0 0.0
    %1484 = vmatprep.subr.mxu0 0.0
    %1485 = vmatpush1.msra.mxu0 0.0
    %1486 = vmatprep.subr.mxu0 0.0
    %1487 = vmatpush1.msra.mxu0 0.0
    %1488 = vmatprep.subr.mxu0 0.0
    %1489 = vmatpush1.msra.mxu0 0.0
    %1490 = vmatprep.subr.mxu0 0.0
    %1491 = vmatpush1.msra.mxu0 0.0
    %1492 = vmatprep.subr.mxu0 0.0
    %1493 = vmatpush1.msra.mxu0 0.0
    %1494 = vmatprep.subr.mxu0 0.0
    %1495 = vmatpush1.msra.mxu0 0.0
    %1496 = vmatprep.subr.mxu0 0.0
    %1497 = vmatpush1.msra.mxu0 0.0
    %1498 = vmatprep.subr.mxu0 0.0
    %1499 = vmatpush1.msra.mxu0 %v1478
    %1500 = vmatprep.subr.mxu0 0.0
    %1501 = vmatpush1.msra.mxu0 %v1477
    %1502 = vmatprep.subr.mxu0 0.0
    %1503 = vmatpush1.msra.mxu0 %v1476
    %1504 = vmatprep.subr.mxu0 0.0
    %1505 = vmatpush1.msra.mxu0 %v1475
    %1506 = vmatprep.subr.mxu0 0.0
    %1507 = vmatpush1.msra.mxu0 %v1474
    %1508 = vmatprep.subr.mxu0 0.0
    %1509 = vmatpush1.msra.mxu0 %v1473
    %1510 = vmatprep.subr.mxu0 0.0
    %1511 = vmatpush1.msra.mxu0 %v1472
    %1512 = vmatprep.subr.mxu0 0.0
    %1513 = vmatpush1.msra.mxu0 %v1471
    %1514 = vmatprep.subr.mxu0 0.0
    %1515 = vmatpush2.msra.mxu0 0.0
    %1516 = vmatprep.subr.mxu0 0.0
    %1517 = vmatpush2.msra.mxu0 0.0
    %1518 = vmatprep.subr.mxu0 0.0
    %1519 = vmatpush2.msra.mxu0 0.0
    %1520 = vmatprep.subr.mxu0 0.0
    %1521 = vmatpush2.msra.mxu0 0.0
    %1522 = vmatprep.subr.mxu0 0.0
    %1523 = vmatpush2.msra.mxu0 0.0
    %1524 = vmatprep.subr.mxu0 0.0
    %1525 = vmatpush2.msra.mxu0 0.0
    %1526 = vmatprep.subr.mxu0 0.0
    %1527 = vmatpush2.msra.mxu0 0.0
    %1528 = vmatprep.subr.mxu0 0.0
    %1529 = vmatpush2.msra.mxu0 0.0
    %1530 = vmatprep.subr.mxu0 0.0
    %1531 = vmatpush2.msra.mxu0 0.0
    %1532 = vmatprep.subr.mxu0 0.0
    %1533 = vmatpush2.msra.mxu0 0.0
    %1534 = vmatprep.subr.mxu0 0.0
    %1535 = vmatpush2.msra.mxu0 0.0
    %1536 = vmatprep.subr.mxu0 0.0
    %1537 = vmatpush2.msra.mxu0 0.0
    %1538 = vmatprep.subr.mxu0 0.0
    %1539 = vmatpush2.msra.mxu0 0.0
    %1540 = vmatprep.subr.mxu0 0.0
    %1541 = vmatpush2.msra.mxu0 0.0
    %1542 = vmatprep.subr.mxu0 0.0
    %1543 = vmatpush2.msra.mxu0 0.0
    %1544 = vmatprep.subr.mxu0 0.0
    %1545 = vmatpush2.msra.mxu0 0.0
    %1546 = vmatprep.mubr.f32.mxu0 0.0
    %1547 = vmatmul.mubr.f32.gmra.mxu0 %v1480
    %v1548 = vpop.f32.mrf.mxu0
    %v1549 = vadd.f32 0.0, %v1548
    %v1550 = vpop.f32.mrf.mxu0
    %1551 = vdwg.mxu0
    %v1552 = vadd.f32 %v1467, %v1549
    %s1553 = sadd.s32 %s1297, 3
    %s1554 = smul.u32 %s1553, 64
    %s1555 = scalar_lea.vmem %s8, %s1554
    %v1556 = vld [vmem:[%s1555] sm:$0xff]
    %v1557 = vld [vmem:[%s1555 + $0x8] sm:$0xff]
    %v1558 = vld [vmem:[%s1555 + $0x10] sm:$0xff]
    %v1559 = vld [vmem:[%s1555 + $0x18] sm:$0xff]
    %v1560 = vld [vmem:[%s1555 + $0x20] sm:$0xff]
    %v1561 = vld [vmem:[%s1555 + $0x28] sm:$0xff]
    %v1562 = vld [vmem:[%s1555 + $0x30] sm:$0xff]
    %v1563 = vld [vmem:[%s1555 + $0x38] sm:$0xff]
    %v1564 = vrot.slane %v1296, 6
    %v1565 = vsel %vm1308, %v1564, 0
    %1567 = vmatprep.subr.mxu0 0.0
    %1568 = vmatpush1.msra.mxu0 0.0
    %1569 = vmatprep.subr.mxu0 0.0
    %1570 = vmatpush1.msra.mxu0 0.0
    %1571 = vmatprep.subr.mxu0 0.0
    %1572 = vmatpush1.msra.mxu0 0.0
    %1573 = vmatprep.subr.mxu0 0.0
    %1574 = vmatpush1.msra.mxu0 0.0
    %1575 = vmatprep.subr.mxu0 0.0
    %1576 = vmatpush1.msra.mxu0 0.0
    %1577 = vmatprep.subr.mxu0 0.0
    %1578 = vmatpush1.msra.mxu0 0.0
    %1579 = vmatprep.subr.mxu0 0.0
    %1580 = vmatpush1.msra.mxu0 0.0
    %1581 = vmatprep.subr.mxu0 0.0
    %1582 = vmatpush1.msra.mxu0 0.0
    %1583 = vmatprep.subr.mxu0 0.0
    %1584 = vmatpush1.msra.mxu0 %v1563
    %1585 = vmatprep.subr.mxu0 0.0
    %1586 = vmatpush1.msra.mxu0 %v1562
    %1587 = vmatprep.subr.mxu0 0.0
    %1588 = vmatpush1.msra.mxu0 %v1561
    %1589 = vmatprep.subr.mxu0 0.0
    %1590 = vmatpush1.msra.mxu0 %v1560
    %1591 = vmatprep.subr.mxu0 0.0
    %1592 = vmatpush1.msra.mxu0 %v1559
    %1593 = vmatprep.subr.mxu0 0.0
    %1594 = vmatpush1.msra.mxu0 %v1558
    %1595 = vmatprep.subr.mxu0 0.0
    %1596 = vmatpush1.msra.mxu0 %v1557
    %1597 = vmatprep.subr.mxu0 0.0
    %1598 = vmatpush1.msra.mxu0 %v1556
    %1599 = vmatprep.subr.mxu0 0.0
    %1600 = vmatpush2.msra.mxu0 0.0
    %1601 = vmatprep.subr.mxu0 0.0
    %1602 = vmatpush2.msra.mxu0 0.0
    %1603 = vmatprep.subr.mxu0 0.0
    %1604 = vmatpush2.msra.mxu0 0.0
    %1605 = vmatprep.subr.mxu0 0.0
    %1606 = vmatpush2.msra.mxu0 0.0
    %1607 = vmatprep.subr.mxu0 0.0
    %1608 = vmatpush2.msra.mxu0 0.0
    %1609 = vmatprep.subr.mxu0 0.0
    %1610 = vmatpush2.msra.mxu0 0.0
    %1611 = vmatprep.subr.mxu0 0.0
    %1612 = vmatpush2.msra.mxu0 0.0
    %1613 = vmatprep.subr.mxu0 0.0
    %1614 = vmatpush2.msra.mxu0 0.0
    %1615 = vmatprep.subr.mxu0 0.0
    %1616 = vmatpush2.msra.mxu0 0.0
    %1617 = vmatprep.subr.mxu0 0.0
    %1618 = vmatpush2.msra.mxu0 0.0
    %1619 = vmatprep.subr.mxu0 0.0
    %1620 = vmatpush2.msra.mxu0 0.0
    %1621 = vmatprep.subr.mxu0 0.0
    %1622 = vmatpush2.msra.mxu0 0.0
    %1623 = vmatprep.subr.mxu0 0.0
    %1624 = vmatpush2.msra.mxu0 0.0
    %1625 = vmatprep.subr.mxu0 0.0
    %1626 = vmatpush2.msra.mxu0 0.0
    %1627 = vmatprep.subr.mxu0 0.0
    %1628 = vmatpush2.msra.mxu0 0.0
    %1629 = vmatprep.subr.mxu0 0.0
    %1630 = vmatpush2.msra.mxu0 0.0
    %1631 = vmatprep.mubr.f32.mxu0 0.0
    %1632 = vmatmul.mubr.f32.gmra.mxu0 %v1565
    %v1633 = vpop.f32.mrf.mxu0
    %v1634 = vadd.f32 0.0, %v1633
    %v1635 = vpop.f32.mrf.mxu0
    %1636 = vdwg.mxu0
    %v1637 = vadd.f32 %v1552, %v1634
  $region69: #{deepfamq_forward.1} parent=0 // loop_footer
    %s1292 = sadd.s32 1, %s1288
  $region70: #{deepfamq_forward.1} parent=0 // loop_footer_branch
    %1287 = sbr.rel target = $region66
  $region71: #{deepfamq_forward.1} parent=0 // loop_exit
    _
  %v1638 = vld [vmem:[%s9] sm:$0x1]
  %v1640 = vlaneseq
  %v1641 = vshrl.u32 %v1640, 7
  %v1642 = vsub.s32 0, %v1641
  %v1643 = vrot.slane %v1638, %v1642
  %v1645 = vadd.f32 %v1293, %v1643
  %v1646 = vmax.f32 %v1645, 0.0
  %v1647 = vld [vmem:[%s10] sm:$0xff]
  %v1648 = vld [vmem:[%s10 + $0x8] sm:$0xff]
  %v1649 = vld [vmem:[%s10 + $0x10] sm:$0xff]
  %v1650 = vld [vmem:[%s10 + $0x18] sm:$0xff]
  %v1651 = vld [vmem:[%s11] sm:$0x1]
  %v1653 = vlaneseq
  %v1654 = vshrl.u32 %v1653, 7
  %v1655 = vsub.s32 0, %v1654
  %v1656 = vrot.slane %v1651, %v1655
  %v1659 = vsel %vm469, %v1646, 0
  %1661 = vmatprep.subr.mxu0 0.0
  %1662 = vmatpush1.msra.mxu0 0.0
  %1663 = vmatprep.subr.mxu0 0.0
  %1664 = vmatpush1.msra.mxu0 0.0
  %1665 = vmatprep.subr.mxu0 0.0
  %1666 = vmatpush1.msra.mxu0 0.0
  %1667 = vmatprep.subr.mxu0 0.0
  %1668 = vmatpush1.msra.mxu0 0.0
  %1669 = vmatprep.subr.mxu0 0.0
  %1670 = vmatpush1.msra.mxu0 0.0
  %1671 = vmatprep.subr.mxu0 0.0
  %1672 = vmatpush1.msra.mxu0 0.0
  %1673 = vmatprep.subr.mxu0 0.0
  %1674 = vmatpush1.msra.mxu0 0.0
  %1675 = vmatprep.subr.mxu0 0.0
  %1676 = vmatpush1.msra.mxu0 0.0
  %1677 = vmatprep.subr.mxu0 0.0
  %1678 = vmatpush1.msra.mxu0 0.0
  %1679 = vmatprep.subr.mxu0 0.0
  %1680 = vmatpush1.msra.mxu0 0.0
  %1681 = vmatprep.subr.mxu0 0.0
  %1682 = vmatpush1.msra.mxu0 0.0
  %1683 = vmatprep.subr.mxu0 0.0
  %1684 = vmatpush1.msra.mxu0 0.0
  %1685 = vmatprep.subr.mxu0 0.0
  %1686 = vmatpush1.msra.mxu0 %v1650
  %1687 = vmatprep.subr.mxu0 0.0
  %1688 = vmatpush1.msra.mxu0 %v1649
  %1689 = vmatprep.subr.mxu0 0.0
  %1690 = vmatpush1.msra.mxu0 %v1648
  %1691 = vmatprep.subr.mxu0 0.0
  %1692 = vmatpush1.msra.mxu0 %v1647
  %1693 = vmatprep.subr.mxu0 0.0
  %1694 = vmatpush2.msra.mxu0 0.0
  %1695 = vmatprep.subr.mxu0 0.0
  %1696 = vmatpush2.msra.mxu0 0.0
  %1697 = vmatprep.subr.mxu0 0.0
  %1698 = vmatpush2.msra.mxu0 0.0
  %1699 = vmatprep.subr.mxu0 0.0
  %1700 = vmatpush2.msra.mxu0 0.0
  %1701 = vmatprep.subr.mxu0 0.0
  %1702 = vmatpush2.msra.mxu0 0.0
  %1703 = vmatprep.subr.mxu0 0.0
  %1704 = vmatpush2.msra.mxu0 0.0
  %1705 = vmatprep.subr.mxu0 0.0
  %1706 = vmatpush2.msra.mxu0 0.0
  %1707 = vmatprep.subr.mxu0 0.0
  %1708 = vmatpush2.msra.mxu0 0.0
  %1709 = vmatprep.subr.mxu0 0.0
  %1710 = vmatpush2.msra.mxu0 0.0
  %1711 = vmatprep.subr.mxu0 0.0
  %1712 = vmatpush2.msra.mxu0 0.0
  %1713 = vmatprep.subr.mxu0 0.0
  %1714 = vmatpush2.msra.mxu0 0.0
  %1715 = vmatprep.subr.mxu0 0.0
  %1716 = vmatpush2.msra.mxu0 0.0
  %1717 = vmatprep.subr.mxu0 0.0
  %1718 = vmatpush2.msra.mxu0 0.0
  %1719 = vmatprep.subr.mxu0 0.0
  %1720 = vmatpush2.msra.mxu0 0.0
  %1721 = vmatprep.subr.mxu0 0.0
  %1722 = vmatpush2.msra.mxu0 0.0
  %1723 = vmatprep.subr.mxu0 0.0
  %1724 = vmatpush2.msra.mxu0 0.0
  %1725 = vmatprep.mubr.f32.mxu0 0.0
  %1726 = vmatmul.mubr.f32.gmra.mxu0 %v1659
  %v1727 = vpop.f32.mrf.mxu0
  %v1728 = vadd.f32 %v1656, %v1727
  %v1729 = vpop.f32.mrf.mxu0
  %1730 = vdwg.mxu0
  %v1731 = vmax.f32 %v1728, 0.0
  %v1732 = vld [vmem:[%s12] sm:$0xff]
  %v1733 = vld [vmem:[%s12 + $0x8] sm:$0xff]
  %v1734 = vld [vmem:[%s12 + $0x10] sm:$0xff]
  %v1735 = vld [vmem:[%s12 + $0x18] sm:$0xff]
  %v1736 = vld [vmem:[#allocation4] sm:$0x1]
  %v1738 = vlaneseq
  %v1739 = vshrl.u32 %v1738, 7
  %v1740 = vsub.s32 0, %v1739
  %v1741 = vrot.slane %v1736, %v1740
  %v1744 = vsel %vm469, %v1731, 0
  %1746 = vmatprep.subr.mxu0 0.0
  %1747 = vmatpush1.msra.mxu0 0.0
  %1748 = vmatprep.subr.mxu0 0.0
  %1749 = vmatpush1.msra.mxu0 0.0
  %1750 = vmatprep.subr.mxu0 0.0
  %1751 = vmatpush1.msra.mxu0 0.0
  %1752 = vmatprep.subr.mxu0 0.0
  %1753 = vmatpush1.msra.mxu0 0.0
  %1754 = vmatprep.subr.mxu0 0.0
  %1755 = vmatpush1.msra.mxu0 0.0
  %1756 = vmatprep.subr.mxu0 0.0
  %1757 = vmatpush1.msra.mxu0 0.0
  %1758 = vmatprep.subr.mxu0 0.0
  %1759 = vmatpush1.msra.mxu0 0.0
  %1760 = vmatprep.subr.mxu0 0.0
  %1761 = vmatpush1.msra.mxu0 0.0
  %1762 = vmatprep.subr.mxu0 0.0
  %1763 = vmatpush1.msra.mxu0 0.0
  %1764 = vmatprep.subr.mxu0 0.0
  %1765 = vmatpush1.msra.mxu0 0.0
  %1766 = vmatprep.subr.mxu0 0.0
  %1767 = vmatpush1.msra.mxu0 0.0
  %1768 = vmatprep.subr.mxu0 0.0
  %1769 = vmatpush1.msra.mxu0 0.0
  %1770 = vmatprep.subr.mxu0 0.0
  %1771 = vmatpush1.msra.mxu0 %v1735
  %1772 = vmatprep.subr.mxu0 0.0
  %1773 = vmatpush1.msra.mxu0 %v1734
  %1774 = vmatprep.subr.mxu0 0.0
  %1775 = vmatpush1.msra.mxu0 %v1733
  %1776 = vmatprep.subr.mxu0 0.0
  %1777 = vmatpush1.msra.mxu0 %v1732
  %1778 = vmatprep.subr.mxu0 0.0
  %1779 = vmatpush2.msra.mxu0 0.0
  %1780 = vmatprep.subr.mxu0 0.0
  %1781 = vmatpush2.msra.mxu0 0.0
  %1782 = vmatprep.subr.mxu0 0.0
  %1783 = vmatpush2.msra.mxu0 0.0
  %1784 = vmatprep.subr.mxu0 0.0
  %1785 = vmatpush2.msra.mxu0 0.0
  %1786 = vmatprep.subr.mxu0 0.0
  %1787 = vmatpush2.msra.mxu0 0.0
  %1788 = vmatprep.subr.mxu0 0.0
  %1789 = vmatpush2.msra.mxu0 0.0
  %1790 = vmatprep.subr.mxu0 0.0
  %1791 = vmatpush2.msra.mxu0 0.0
  %1792 = vmatprep.subr.mxu0 0.0
  %1793 = vmatpush2.msra.mxu0 0.0
  %1794 = vmatprep.subr.mxu0 0.0
  %1795 = vmatpush2.msra.mxu0 0.0
  %1796 = vmatprep.subr.mxu0 0.0
  %1797 = vmatpush2.msra.mxu0 0.0
  %1798 = vmatprep.subr.mxu0 0.0
  %1799 = vmatpush2.msra.mxu0 0.0
  %1800 = vmatprep.subr.mxu0 0.0
  %1801 = vmatpush2.msra.mxu0 0.0
  %1802 = vmatprep.subr.mxu0 0.0
  %1803 = vmatpush2.msra.mxu0 0.0
  %1804 = vmatprep.subr.mxu0 0.0
  %1805 = vmatpush2.msra.mxu0 0.0
  %1806 = vmatprep.subr.mxu0 0.0
  %1807 = vmatpush2.msra.mxu0 0.0
  %1808 = vmatprep.subr.mxu0 0.0
  %1809 = vmatpush2.msra.mxu0 0.0
  %1810 = vmatprep.mubr.f32.mxu0 0.0
  %1811 = vmatmul.mubr.f32.gmra.mxu0 %v1744
  %v1812 = vpop.f32.mrf.mxu0
  %v1813 = vadd.f32 %v1741, %v1812
  %v1814 = vpop.f32.mrf.mxu0
  %1815 = vdwg.mxu0
  %vm1816 = vcmask 1024
  %1817 = vst.msk [vmem:[%s14] sm:$0x3] %vm1816, %v1813
  // Predicated region
  $region72: #{deepfamq_forward.1} parent=0 // pred_check
    _
  $region73: #{deepfamq_forward.1} parent=0 // pred_check_branch
    %1819 = sbr.rel (0) target = $region75
  $region74: #{deepfamq_forward.1} parent=0 // pred_region
    _
  $region75: #{deepfamq_forward.1} parent=0 // pred_fallthru
    _
  // Predicated region
  $region76: #{deepfamq_forward.1} parent=0 // pred_check
    _
  $region77: #{deepfamq_forward.1} parent=0 // pred_check_branch
    %1821 = sbr.rel (0) target = $region79
  $region78: #{deepfamq_forward.1} parent=0 // pred_region
    _
  $region79: #{deepfamq_forward.1} parent=0 // pred_fallthru
    _

</llo_original>
